<compile_context>
chip_gen: v7x
topology: tpu7x:2x2x1
jax: 0.10.0
libtpu: 0.0.40
codegen_flags: <defaults>
</compile_context>

<pallas_src>
import functools

import jax
import jax.numpy as jnp
from jax import lax
from jax.experimental import pallas as pl
from jax.experimental.pallas import tpu as pltpu

_LANES = 128
_SUBLANES = 8


def _round_up(n, m):
    return ((n + m - 1) // m) * m


# ----------------------------- kernel helpers ------------------------------

def _layer_norm(y, gamma, beta, eps, c_real):
    """LayerNorm over the (lane-padded) channel axis.

    Matches the PyTorch module's LayerNorm: mean and *unbiased* variance
    (torch.var default, divide by C-1) over the real channel count, then
    gamma * x_hat + beta.  Padded channels of `y` are exactly zero; their
    deviations are masked out of the variance, and gamma/beta are zero-padded
    so padded output channels stay identically zero.
    """
    cp = y.shape[-1]
    mean = jnp.sum(y, axis=-1, keepdims=True) * (1.0 / c_real)
    diff = y - mean
    if cp != c_real:
        mask = lax.broadcasted_iota(jnp.int32, (1, cp), 1) < c_real
        diff = jnp.where(mask, diff, 0.0)
    var = jnp.sum(diff * diff, axis=-1, keepdims=True) * (1.0 / (c_real - 1))
    inv = lax.rsqrt(var + eps)           # EUP rsqrt instead of a VPU divide
    return gamma * (diff * inv) + beta


def _conv_lhs(src_ref, t0, rows, pad, dilation, kernel_size):
    """Build the fused causal-conv LHS (Bt*rows, K*Cp) from a padded scratch.

    Tap j of the causal dilated conv needs x[t - (K-1-j)*dilation]; each tap
    is a shifted (Bt, rows, Cp) window of the left-zero-padded scratch.  The
    K windows are concatenated along the lane axis (each piece is a multiple
    of 128 lanes, so no relayout copy is expected -- verify in the Mosaic
    dump) so one (M, K*Cp) @ (K*Cp, Cp) MXU matmul replaces K matmuls plus
    K-1 VPU accumulate adds.
    """
    bt = src_ref.shape[0]
    cp = src_ref.shape[-1]
    taps = []
    for j in range(kernel_size):
        shift = (kernel_size - 1 - j) * dilation
        start = pad - shift + t0          # static when t0 is a Python int
        win = src_ref[:, pl.ds(start, rows), :]
        taps.append(win.reshape(bt * rows, cp))
    if kernel_size == 1:
        return taps[0]
    return jnp.concatenate(taps, axis=-1)


# --------------------------------- kernel ----------------------------------

def residual_block_kernel(x_ref, w1_ref, b1_ref, g1_ref, be1_ref,
                          w2_ref, b2_ref, g2_ref, be2_ref, o_ref,
                          xpad_ref, ypad_ref,
                          *, dilation, kernel_size, eps, c_real, pad,
                          chunk_rows):
    bt, seq_len, cp = x_ref.shape
    n_chunks = seq_len // chunk_rows

    # Zero the causal prefixes every grid step (each megacore core owns its
    # own scratch, so a program_id()==0 guard would be unsafe).  `pad` is
    # rounded to a sublane multiple in the wrapper => 8-aligned stores.
    if pad > 0:
        zeros = jnp.zeros((bt, pad, cp), xpad_ref.dtype)
        xpad_ref[:, :pad, :] = zeros
        ypad_ref[:, :pad, :] = zeros

    def conv_ln_relu(src_ref, w_ref, b_ref, g_ref, be_ref, dil, t0, rows):
        lhs = _conv_lhs(src_ref, t0, rows, pad, dil, kernel_size)
        y = jnp.dot(lhs, w_ref[...], preferred_element_type=jnp.float32)
        y = _layer_norm(y + b_ref[...], g_ref[...], be_ref[...], eps, c_real)
        return jnp.maximum(y, 0.0)

    def pass1(t0):
        # Stage this chunk of x (bf16) for conv1; earlier chunks / the zero
        # prefix provide the causal halo.  Storing per chunk interleaves the
        # bf16 writebacks with MXU work (v5e has a single vst slot).
        xpad_ref[:, pl.ds(pad + t0, chunk_rows), :] = (
            x_ref[:, pl.ds(t0, chunk_rows), :].astype(xpad_ref.dtype))
        y = conv_ln_relu(xpad_ref, w1_ref, b1_ref, g1_ref, be1_ref,
                         dilation, t0, chunk_rows)
        # conv1 -> conv2 intermediate is kept in bf16 (MXU operand precision;
        # deliberate precision trade-off, matches the bf16 matmul operands).
        ypad_ref[:, pl.ds(pad + t0, chunk_rows), :] = (
            y.astype(ypad_ref.dtype).reshape(bt, chunk_rows, cp))

    def pass2(t0):
        y = conv_ln_relu(ypad_ref, w2_ref, b2_ref, g2_ref, be2_ref,
                         2 * dilation, t0, chunk_rows)
        # Re-read x for the residual instead of holding it live across both
        # convolutions (keeps vreg pressure bounded at large M).
        xres = x_ref[:, pl.ds(t0, chunk_rows), :].astype(jnp.float32)
        out = xres.reshape(bt * chunk_rows, cp) + y
        o_ref[:, pl.ds(t0, chunk_rows), :] = (
            out.reshape(bt, chunk_rows, cp).astype(o_ref.dtype))

    if n_chunks == 1:
        # Fully static path (small tiles): no dynamic slicing at all.
        pass1(0)
        pass2(0)
    else:
        # Chunk the sequence axis so f32 intermediates stay in vregs.  conv2
        # of chunk c only reads conv1 outputs at rows <= t0 + chunk_rows, all
        # produced by the first (completed) pass.
        def body1(c, carry):
            pass1(pl.multiple_of(c * chunk_rows, chunk_rows))
            return carry

        def body2(c, carry):
            pass2(pl.multiple_of(c * chunk_rows, chunk_rows))
            return carry

        lax.fori_loop(0, n_chunks, body1, 0)
        lax.fori_loop(0, n_chunks, body2, 0)


# ------------------------------ tile heuristics -----------------------------

def _vmem_capacity_bytes():
    try:
        return int(pltpu.get_tpu_info().vmem_capacity_bytes)
    except Exception:  # unknown chip / older jax: assume the smallest (v7x TC)
        return 64 * 1024 * 1024


def _tile_vmem_bytes(bt, L, cp, K, pad):
    """Rough per-grid-step VMEM footprint used to bound batch_tile."""
    io_block = bt * L * cp * 4                  # f32 x block / out block
    scratch = 2 * bt * (pad + L) * cp * 2       # two bf16 padded scratches
    weights = 2 * K * cp * cp * 2               # two stacked bf16 weight mats
    work = 3 * bt * L * cp * 4                  # in-flight f32 intermediates
    return 2 * 2 * io_block + scratch + 2 * weights + work + (2 << 20)


def _auto_batch_tile(B, L, cp, K, pad, budget, target_rows=512):
    """Largest batch tile whose M = Bt*L stays near `target_rows`, fits the
    VMEM budget and keeps the grid >= 2 steps (both v7x TensorCores get work
    and the pipeline can overlap DMA with compute).  Tune `batch_tile`
    explicitly for production shapes (prefer an even grid with >= 4 steps on
    v7x)."""
    best = 1
    for bt in range(1, B + 1):
        if B % bt:
            continue
        if bt > 1 and bt * L > target_rows:
            break
        if _tile_vmem_bytes(bt, L, cp, K, pad) > budget:
            break
        if B > 1 and B // bt < 2:
            continue
        best = bt
    return best


def _auto_chunk_rows(L, bt, target_rows=256):
    """Sequence-chunk length for the in-kernel passes: keeps the per-chunk
    working set (bt*chunk, Cp) near `target_rows` rows (vreg-resident)."""
    if bt * L <= target_rows:
        return L
    max_rows = max(_SUBLANES, target_rows // bt)
    best = None
    r = _SUBLANES
    while r <= min(L, max_rows):
        if L % r == 0:
            best = r
        r += _SUBLANES
    return best if best is not None else L


# -------------------------------- wrapper ----------------------------------

def cp_residual_block(x, w1, b1, g1, be1, w2, b2, g2, be2, *,
                      dilation, kernel_size, eps=1e-8,
                      batch_tile=None, chunk_rows=None,
                      channels=None, trim_output=False, out_dtype=None,
                      vmem_limit_bytes=None, single_buffer_constants=True):
    """Forward pass of CpResidualBlockAdjacentBlock.

    x:       (B, L, C) activations, channel-last.  An already lane-padded
             (B, L, Cp) input is accepted when `channels` gives the real C,
             so stacked blocks can chain on the padded layout.
    w1, w2:  (K, C, C) conv weights laid out (tap, in, out).
    b*, g*, be*: (C,) or (1, C) bias / LayerNorm gamma / beta.

    By default the lane-padded (B, L, Cp) output is returned (no per-block
    depad copy); set trim_output=True to slice back to (B, L, C).
    """
    B, L, cx = x.shape
    K = kernel_size
    c_real = int(channels) if channels is not None else int(cx)
    assert c_real >= 2, "LayerNorm with unbiased variance needs >= 2 channels"
    Cp = _round_up(c_real, _LANES)
    assert cx in (c_real, Cp), "input channel axis must be C or lane-padded Cp"
    out_dtype = x.dtype if out_dtype is None else out_dtype
    # Causal prefix covering the larger 2*dilation shift of conv2, rounded up
    # to a sublane multiple so prefix stores / shift-0 reads are 8-aligned.
    pad = _round_up((K - 1) * 2 * dilation, _SUBLANES)

    def _as_row(v):
        return jnp.asarray(v, jnp.float32).reshape(1, -1)

    b1, b2, g1, g2, be1, be2 = map(_as_row, (b1, b2, g1, g2, be1, be2))

    # Lane-dense channel padding; zero-padded weights/bias/gamma/beta keep the
    # padded channels identically zero through the whole block.
    pad_c = Cp - c_real
    if pad_c:
        if cx == c_real:
            x = jnp.pad(x, ((0, 0), (0, 0), (0, pad_c)))
        w1 = jnp.pad(w1, ((0, 0), (0, pad_c), (0, pad_c)))
        w2 = jnp.pad(w2, ((0, 0), (0, pad_c), (0, pad_c)))
        b1, b2, g1, g2, be1, be2 = (
            jnp.pad(v, ((0, 0), (0, pad_c))) for v in (b1, b2, g1, g2, be1, be2))

    # Fused contraction: stack the K taps along the contraction axis so each
    # conv is one (M, K*Cp) @ (K*Cp, Cp) MXU matmul.  bf16 operands, f32 acc.
    w1f = jnp.asarray(w1, jnp.bfloat16).reshape(K * Cp, Cp)
    w2f = jnp.asarray(w2, jnp.bfloat16).reshape(K * Cp, Cp)

    vmem_cap = _vmem_capacity_bytes()
    if batch_tile is None:
        batch_tile = _auto_batch_tile(B, L, Cp, K, pad, budget=vmem_cap // 2)
    assert B % batch_tile == 0, "batch must be divisible by batch_tile"
    Bt = batch_tile
    if chunk_rows is None:
        chunk_rows = _auto_chunk_rows(L, Bt)
    assert L % chunk_rows == 0, "seqlen must be divisible by chunk_rows"
    if vmem_limit_bytes is None:
        # ~75% of physical VMEM: ~96 MiB on v5e/v6e (128 MiB), ~48 MiB on v7x.
        vmem_limit_bytes = int(vmem_cap * 3 // 4)

    kern = functools.partial(residual_block_kernel, dilation=dilation,
                             kernel_size=K, eps=eps, c_real=c_real, pad=pad,
                             chunk_rows=chunk_rows)

    x_spec = pl.BlockSpec((Bt, L, Cp), lambda b: (b, 0, 0))
    o_spec = pl.BlockSpec((Bt, L, Cp), lambda b: (b, 0, 0))

    def build_call(single_buffer):
        def const_spec(shape):
            idx = lambda b: (0,) * len(shape)
            if single_buffer:
                # Constants never change across the grid -> no need for the
                # default double-buffering; frees VMEM for bigger tiles (v7x).
                return pl.BlockSpec(shape, idx, pipeline_mode=pl.Buffered(1))
            return pl.BlockSpec(shape, idx)

        grid_spec = pltpu.PrefetchScalarGridSpec(
            num_scalar_prefetch=0,
            grid=(B // Bt,),
            in_specs=[
                x_spec,
                const_spec((K * Cp, Cp)),   # w1 (taps stacked on contraction)
                const_spec((1, Cp)),        # b1
                const_spec((1, Cp)),        # gamma1
                const_spec((1, Cp)),        # beta1
                const_spec((K * Cp, Cp)),   # w2
                const_spec((1, Cp)),        # b2
                const_spec((1, Cp)),        # gamma2
                const_spec((1, Cp)),        # beta2
            ],
            out_specs=o_spec,
            scratch_shapes=[
                # Left-zero-padded bf16 conv inputs: x for conv1, relu1 output
                # for conv2 (separate scratch so chunked conv1 writeback never
                # races conv2's halo reads).
                pltpu.VMEM((Bt, pad + L, Cp), jnp.bfloat16),
                pltpu.VMEM((Bt, pad + L, Cp), jnp.bfloat16),
            ],
        )
        return pl.pallas_call(
            kern,
            out_shape=jax.ShapeDtypeStruct((B, L, Cp), out_dtype),
            grid_spec=grid_spec,
            compiler_params=pltpu.CompilerParams(
                dimension_semantics=("parallel",),
                vmem_limit_bytes=vmem_limit_bytes,
            ),
        )

    args = (x, w1f, b1, g1, be1, w2f, b2, g2, be2)
    single_buffer = single_buffer_constants and hasattr(pl, "Buffered")
    if single_buffer:
        try:
            out = build_call(True)(*args)
        except Exception:   # JAX version without pipeline_mode support
            out = build_call(False)(*args)
    else:
        out = build_call(False)(*args)

    return out[:, :, :c_real] if (trim_output and pad_c) else out


# ------------------------- pure-JAX f32 reference ---------------------------

def _ref_forward(x, w1, b1, g1, be1, w2, b2, g2, be2,
                 *, dilation, kernel_size, eps=1e-8):
    def conv(xb, w, b, d):
        L, _ = xb.shape
        acc = jnp.zeros((L, w.shape[-1]), jnp.float32)
        for j in range(kernel_size):
            s = (kernel_size - 1 - j) * d
            shifted = jnp.pad(xb, ((s, 0), (0, 0)))[:L]
            acc = acc + shifted @ w[j]
        return acc + b

    def ln(y, g, be):
        c = y.shape[-1]
        m = y.mean(-1, keepdims=True)
        v = jnp.sum((y - m) ** 2, axis=-1, keepdims=True) / (c - 1)
        return g * ((y - m) / jnp.sqrt(v + eps)) + be

    def one(xb):
        y = jnp.maximum(ln(conv(xb, w1, b1, dilation), g1, be1), 0.0)
        y = jnp.maximum(ln(conv(y, w2, b2, 2 * dilation), g2, be2), 0.0)
        return xb + y

    return jax.vmap(one)(x)


# ---------------------------------- main ------------------------------------

if __name__ == "__main__":
    B, L, C = 2, 16, 32          # batch, seqlen, channels (in == out channels)
    K, DIL = 3, 1                # kernel_size, dilation
    EPS = 1e-8

    key = jax.random.PRNGKey(0)
    kx, kw1, kb1, kw2, kb2 = jax.random.split(key, 5)

    x = jax.random.normal(kx, (B, L, C), jnp.float32)

    # Conv2d weights are (C_out, C_in, 1, K); fold to (K, C_in, C_out).
    w1_torch = jax.random.normal(kw1, (C, C, 1, K), jnp.float32) * 0.1
    w2_torch = jax.random.normal(kw2, (C, C, 1, K), jnp.float32) * 0.1
    w1 = jnp.transpose(w1_torch[:, :, 0, :], (2, 1, 0))   # (K, C_in, C_out)
    w2 = jnp.transpose(w2_torch[:, :, 0, :], (2, 1, 0))
    b1 = jax.random.normal(kb1, (C,), jnp.float32) * 0.1
    b2 = jax.random.normal(kb2, (C,), jnp.float32) * 0.1

    # LayerNorm params as in the module __init__: gamma = 1, beta = 0.
    g1 = jnp.ones((C,), jnp.float32)
    be1 = jnp.zeros((C,), jnp.float32)
    g2 = jnp.ones((C,), jnp.float32)
    be2 = jnp.zeros((C,), jnp.float32)

    out = cp_residual_block(x, w1, b1, g1, be1, w2, b2, g2, be2,
                            dilation=DIL, kernel_size=K, eps=EPS)
    out = jax.block_until_ready(out)

    # The kernel returns the lane-padded (B, L, Cp) layout so stacked blocks
    # chain without a per-block depad copy; depad once here for the check.
    Cp = ((C + 127) // 128) * 128
    assert out.shape == (B, L, Cp)
    out_c = out[:, :, :C]

    ref = _ref_forward(x, w1, b1, g1, be1, w2, b2, g2, be2,
                       dilation=DIL, kernel_size=K, eps=EPS)
    # bf16 MXU operands / bf16 conv1->conv2 intermediate => loose tolerance.
    assert jnp.allclose(out_c, ref, rtol=5e-2, atol=5e-2), "mismatch vs reference"
    # Padded channels must stay identically zero so chained blocks stay exact.
    assert not bool(jnp.any(out[:, :, C:])), "padded channels not zero"

    print("KERNEL_OK")
</pallas_src>

<mosaic_0001>
module attributes {stable_mosaic.version = 11 : i64} {
  func.func @residual_block_kernel(%arg0: i32, %arg1: memref<1x16x128xf32, #tpu.memory_space<vmem>>, %arg2: memref<384x128xbf16, #tpu.memory_space<vmem>>, %arg3: memref<1x128xf32, #tpu.memory_space<vmem>>, %arg4: memref<1x128xf32, #tpu.memory_space<vmem>>, %arg5: memref<1x128xf32, #tpu.memory_space<vmem>>, %arg6: memref<384x128xbf16, #tpu.memory_space<vmem>>, %arg7: memref<1x128xf32, #tpu.memory_space<vmem>>, %arg8: memref<1x128xf32, #tpu.memory_space<vmem>>, %arg9: memref<1x128xf32, #tpu.memory_space<vmem>>, %arg10: memref<1x16x128xf32, #tpu.memory_space<vmem>>, %arg11: memref<1x24x128xbf16, #tpu.memory_space<vmem>>, %arg12: memref<1x24x128xbf16, #tpu.memory_space<vmem>>) attributes {dimension_semantics = [#tpu.dimension_semantics<parallel>], iteration_bounds = array<i64: 2>, scalar_prefetch = 0 : i64, scratch_operands = 2 : i64, tpu.core_type = #tpu.core_type<tc>, window_params = [{transform_indices = @transform_0, window_bounds = array<i64: 1, 16, 128>}, {pipeline_mode = #tpu.pipeline_mode<synchronous>, transform_indices = @transform_1, window_bounds = array<i64: 384, 128>}, {pipeline_mode = #tpu.pipeline_mode<synchronous>, transform_indices = @transform_2, window_bounds = array<i64: 1, 128>}, {pipeline_mode = #tpu.pipeline_mode<synchronous>, transform_indices = @transform_3, window_bounds = array<i64: 1, 128>}, {pipeline_mode = #tpu.pipeline_mode<synchronous>, transform_indices = @transform_4, window_bounds = array<i64: 1, 128>}, {pipeline_mode = #tpu.pipeline_mode<synchronous>, transform_indices = @transform_5, window_bounds = array<i64: 384, 128>}, {pipeline_mode = #tpu.pipeline_mode<synchronous>, transform_indices = @transform_6, window_bounds = array<i64: 1, 128>}, {pipeline_mode = #tpu.pipeline_mode<synchronous>, transform_indices = @transform_7, window_bounds = array<i64: 1, 128>}, {pipeline_mode = #tpu.pipeline_mode<synchronous>, transform_indices = @transform_8, window_bounds = array<i64: 1, 128>}, {transform_indices = @transform_9, window_bounds = array<i64: 1, 16, 128>}]} {
    %cst = arith.constant 0.000000e+00 : bf16
    %0 = vector.broadcast %cst : bf16 to vector<1x8x128xbf16>
    %c0 = arith.constant 0 : index
    %c0_0 = arith.constant 0 : index
    %c0_1 = arith.constant 0 : index
    %1 = vector.load %arg11[%c0, %c0_0, %c0_1] : memref<1x24x128xbf16, #tpu.memory_space<vmem>>, vector<1x8x128xbf16>
    tpu.vector_store %arg11[%c0, %c0_0, %c0_1], %0 {strides = array<i32>} : memref<1x24x128xbf16, #tpu.memory_space<vmem>>, vector<1x8x128xbf16>,
    %c0_2 = arith.constant 0 : index
    %c0_3 = arith.constant 0 : index
    %c0_4 = arith.constant 0 : index
    %2 = vector.load %arg12[%c0_2, %c0_3, %c0_4] : memref<1x24x128xbf16, #tpu.memory_space<vmem>>, vector<1x8x128xbf16>
    tpu.vector_store %arg12[%c0_2, %c0_3, %c0_4], %0 {strides = array<i32>} : memref<1x24x128xbf16, #tpu.memory_space<vmem>>, vector<1x8x128xbf16>,
    %c0_5 = arith.constant 0 : index
    %c0_6 = arith.constant 0 : index
    %c0_7 = arith.constant 0 : index
    %3 = vector.load %arg1[%c0_5, %c0_6, %c0_7] : memref<1x16x128xf32, #tpu.memory_space<vmem>>, vector<1x16x128xf32>
    %4 = arith.truncf %3 : vector<1x16x128xf32> to vector<1x16x128xbf16>
    %c0_8 = arith.constant 0 : index
    %c8 = arith.constant 8 : index
    %c0_9 = arith.constant 0 : index
    %5 = vector.load %arg11[%c0_8, %c8, %c0_9] : memref<1x24x128xbf16, #tpu.memory_space<vmem>>, vector<1x16x128xbf16>
    tpu.vector_store %arg11[%c0_8, %c8, %c0_9], %4 {strides = array<i32>} : memref<1x24x128xbf16, #tpu.memory_space<vmem>>, vector<1x16x128xbf16>,
    %c0_10 = arith.constant 0 : index
    %c6 = arith.constant 6 : index
    %c0_11 = arith.constant 0 : index
    %6 = vector.load %arg11[%c0_10, %c6, %c0_11] : memref<1x24x128xbf16, #tpu.memory_space<vmem>>, vector<1x16x128xbf16>
    %7 = vector.shape_cast %6 : vector<1x16x128xbf16> to vector<16x128xbf16>
    %c0_12 = arith.constant 0 : index
    %c7 = arith.constant 7 : index
    %c0_13 = arith.constant 0 : index
    %8 = vector.load %arg11[%c0_12, %c7, %c0_13] : memref<1x24x128xbf16, #tpu.memory_space<vmem>>, vector<1x16x128xbf16>
    %9 = vector.shape_cast %8 : vector<1x16x128xbf16> to vector<16x128xbf16>
    %c0_14 = arith.constant 0 : index
    %c8_15 = arith.constant 8 : index
    %c0_16 = arith.constant 0 : index
    %10 = vector.load %arg11[%c0_14, %c8_15, %c0_16] : memref<1x24x128xbf16, #tpu.memory_space<vmem>>, vector<1x16x128xbf16>
    %11 = vector.shape_cast %10 : vector<1x16x128xbf16> to vector<16x128xbf16>
    %12 = tpu.concatenate %7, %9, %11 in 1 : vector<16x128xbf16>, vector<16x128xbf16>, vector<16x128xbf16> -> vector<16x384xbf16>
    %c0_17 = arith.constant 0 : index
    %c0_18 = arith.constant 0 : index
    %13 = vector.load %arg2[%c0_17, %c0_18] : memref<384x128xbf16, #tpu.memory_space<vmem>>, vector<384x128xbf16>
    %cst_19 = arith.constant dense<0.000000e+00> : vector<16x128xf32>
    %14 = tpu.matmul %12, %13, %cst_19 {dimension_numbers = #tpu.dot_dimension_numbers<[1], [0], [0], [1], [0, 0, 1, 1], [], []>} : vector<16x384xbf16>, vector<384x128xbf16>, vector<16x128xf32> -> vector<16x128xf32>
    %c0_20 = arith.constant 0 : index
    %c0_21 = arith.constant 0 : index
    %15 = vector.load %arg3[%c0_20, %c0_21] : memref<1x128xf32, #tpu.memory_space<vmem>>, vector<1x128xf32>
    %16 = vector.broadcast %15 : vector<1x128xf32> to vector<16x128xf32>
    %17 = arith.addf %14, %16 : vector<16x128xf32>
    %c0_22 = arith.constant 0 : index
    %c0_23 = arith.constant 0 : index
    %18 = vector.load %arg4[%c0_22, %c0_23] : memref<1x128xf32, #tpu.memory_space<vmem>>, vector<1x128xf32>
    %c0_24 = arith.constant 0 : index
    %c0_25 = arith.constant 0 : index
    %19 = vector.load %arg5[%c0_24, %c0_25] : memref<1x128xf32, #tpu.memory_space<vmem>>, vector<1x128xf32>
    %cst_26 = arith.constant dense<0.000000e+00> : vector<16xf32>
    %20 = vector.multi_reduction <add>, %17, %cst_26 [1] : vector<16x128xf32> to vector<16xf32>
    %21 = vector.shape_cast %20 : vector<16xf32> to vector<16x1xf32>
    %cst_27 = arith.constant 3.125000e-02 : f32
    %22 = vector.broadcast %cst_27 : f32 to vector<16x1xf32>
    %23 = arith.mulf %21, %22 : vector<16x1xf32>
    %24 = vector.broadcast %23 : vector<16x1xf32> to vector<16x128xf32>
    %25 = arith.subf %17, %24 : vector<16x128xf32>
    %26 = tpu.iota {dimensions = array<i32: 1>} : vector<1x128xi32>
    %c32_i32 = arith.constant 32 : i32
    %27 = vector.broadcast %c32_i32 : i32 to vector<1x128xi32>
    %28 = arith.cmpi slt, %26, %27 : vector<1x128xi32>
    %cst_28 = arith.constant 0.000000e+00 : f32
    %29 = vector.shape_cast %28 : vector<1x128xi1> to vector<1x128xi1>
    %30 = vector.broadcast %29 : vector<1x128xi1> to vector<16x128xi1>
    %31 = vector.broadcast %cst_28 : f32 to vector<16x128xf32>
    %32 = arith.select %30, %25, %31 : vector<16x128xi1>, vector<16x128xf32>
    %33 = arith.mulf %32, %32 : vector<16x128xf32>
    %cst_29 = arith.constant dense<0.000000e+00> : vector<16xf32>
    %34 = vector.multi_reduction <add>, %33, %cst_29 [1] : vector<16x128xf32> to vector<16xf32>
    %35 = vector.shape_cast %34 : vector<16xf32> to vector<16x1xf32>
    %cst_30 = arith.constant 0.0322580636 : f32
    %36 = vector.broadcast %cst_30 : f32 to vector<16x1xf32>
    %37 = arith.mulf %35, %36 : vector<16x1xf32>
    %cst_31 = arith.constant 9.99999993E-9 : f32
    %38 = vector.broadcast %cst_31 : f32 to vector<16x1xf32>
    %39 = arith.addf %37, %38 : vector<16x1xf32>
    %40 = math.rsqrt %39 : vector<16x1xf32>
    %41 = vector.broadcast %40 : vector<16x1xf32> to vector<16x128xf32>
    %42 = arith.mulf %32, %41 : vector<16x128xf32>
    %43 = vector.broadcast %18 : vector<1x128xf32> to vector<16x128xf32>
    %44 = arith.mulf %43, %42 : vector<16x128xf32>
    %45 = vector.broadcast %19 : vector<1x128xf32> to vector<16x128xf32>
    %46 = arith.addf %44, %45 : vector<16x128xf32>
    %cst_32 = arith.constant 0.000000e+00 : f32
    %47 = vector.broadcast %cst_32 : f32 to vector<16x128xf32>
    %48 = arith.maximumf %46, %47 : vector<16x128xf32>
    %49 = arith.truncf %48 : vector<16x128xf32> to vector<16x128xbf16>
    %50 = vector.shape_cast %49 : vector<16x128xbf16> to vector<1x16x128xbf16>
    %c0_33 = arith.constant 0 : index
    %c8_34 = arith.constant 8 : index
    %c0_35 = arith.constant 0 : index
    %51 = vector.load %arg12[%c0_33, %c8_34, %c0_35] : memref<1x24x128xbf16, #tpu.memory_space<vmem>>, vector<1x16x128xbf16>
    tpu.vector_store %arg12[%c0_33, %c8_34, %c0_35], %50 {strides = array<i32>} : memref<1x24x128xbf16, #tpu.memory_space<vmem>>, vector<1x16x128xbf16>,
    %c0_36 = arith.constant 0 : index
    %c4 = arith.constant 4 : index
    %c0_37 = arith.constant 0 : index
    %52 = vector.load %arg12[%c0_36, %c4, %c0_37] : memref<1x24x128xbf16, #tpu.memory_space<vmem>>, vector<1x16x128xbf16>
    %53 = vector.shape_cast %52 : vector<1x16x128xbf16> to vector<16x128xbf16>
    %c0_38 = arith.constant 0 : index
    %c6_39 = arith.constant 6 : index
    %c0_40 = arith.constant 0 : index
    %54 = vector.load %arg12[%c0_38, %c6_39, %c0_40] : memref<1x24x128xbf16, #tpu.memory_space<vmem>>, vector<1x16x128xbf16>
    %55 = vector.shape_cast %54 : vector<1x16x128xbf16> to vector<16x128xbf16>
    %c0_41 = arith.constant 0 : index
    %c8_42 = arith.constant 8 : index
    %c0_43 = arith.constant 0 : index
    %56 = vector.load %arg12[%c0_41, %c8_42, %c0_43] : memref<1x24x128xbf16, #tpu.memory_space<vmem>>, vector<1x16x128xbf16>
    %57 = vector.shape_cast %56 : vector<1x16x128xbf16> to vector<16x128xbf16>
    %58 = tpu.concatenate %53, %55, %57 in 1 : vector<16x128xbf16>, vector<16x128xbf16>, vector<16x128xbf16> -> vector<16x384xbf16>
    %c0_44 = arith.constant 0 : index
    %c0_45 = arith.constant 0 : index
    %59 = vector.load %arg6[%c0_44, %c0_45] : memref<384x128xbf16, #tpu.memory_space<vmem>>, vector<384x128xbf16>
    %cst_46 = arith.constant dense<0.000000e+00> : vector<16x128xf32>
    %60 = tpu.matmul %58, %59, %cst_46 {dimension_numbers = #tpu.dot_dimension_numbers<[1], [0], [0], [1], [0, 0, 1, 1], [], []>} : vector<16x384xbf16>, vector<384x128xbf16>, vector<16x128xf32> -> vector<16x128xf32>
    %c0_47 = arith.constant 0 : index
    %c0_48 = arith.constant 0 : index
    %61 = vector.load %arg7[%c0_47, %c0_48] : memref<1x128xf32, #tpu.memory_space<vmem>>, vector<1x128xf32>
    %62 = vector.broadcast %61 : vector<1x128xf32> to vector<16x128xf32>
    %63 = arith.addf %60, %62 : vector<16x128xf32>
    %c0_49 = arith.constant 0 : index
    %c0_50 = arith.constant 0 : index
    %64 = vector.load %arg8[%c0_49, %c0_50] : memref<1x128xf32, #tpu.memory_space<vmem>>, vector<1x128xf32>
    %c0_51 = arith.constant 0 : index
    %c0_52 = arith.constant 0 : index
    %65 = vector.load %arg9[%c0_51, %c0_52] : memref<1x128xf32, #tpu.memory_space<vmem>>, vector<1x128xf32>
    %cst_53 = arith.constant dense<0.000000e+00> : vector<16xf32>
    %66 = vector.multi_reduction <add>, %63, %cst_53 [1] : vector<16x128xf32> to vector<16xf32>
    %67 = vector.shape_cast %66 : vector<16xf32> to vector<16x1xf32>
    %cst_54 = arith.constant 3.125000e-02 : f32
    %68 = vector.broadcast %cst_54 : f32 to vector<16x1xf32>
    %69 = arith.mulf %67, %68 : vector<16x1xf32>
    %70 = vector.broadcast %69 : vector<16x1xf32> to vector<16x128xf32>
    %71 = arith.subf %63, %70 : vector<16x128xf32>
    %72 = tpu.iota {dimensions = array<i32: 1>} : vector<1x128xi32>
    %c32_i32_55 = arith.constant 32 : i32
    %73 = vector.broadcast %c32_i32_55 : i32 to vector<1x128xi32>
    %74 = arith.cmpi slt, %72, %73 : vector<1x128xi32>
    %cst_56 = arith.constant 0.000000e+00 : f32
    %75 = vector.shape_cast %74 : vector<1x128xi1> to vector<1x128xi1>
    %76 = vector.broadcast %75 : vector<1x128xi1> to vector<16x128xi1>
    %77 = vector.broadcast %cst_56 : f32 to vector<16x128xf32>
    %78 = arith.select %76, %71, %77 : vector<16x128xi1>, vector<16x128xf32>
    %79 = arith.mulf %78, %78 : vector<16x128xf32>
    %cst_57 = arith.constant dense<0.000000e+00> : vector<16xf32>
    %80 = vector.multi_reduction <add>, %79, %cst_57 [1] : vector<16x128xf32> to vector<16xf32>
    %81 = vector.shape_cast %80 : vector<16xf32> to vector<16x1xf32>
    %cst_58 = arith.constant 0.0322580636 : f32
    %82 = vector.broadcast %cst_58 : f32 to vector<16x1xf32>
    %83 = arith.mulf %81, %82 : vector<16x1xf32>
    %cst_59 = arith.constant 9.99999993E-9 : f32
    %84 = vector.broadcast %cst_59 : f32 to vector<16x1xf32>
    %85 = arith.addf %83, %84 : vector<16x1xf32>
    %86 = math.rsqrt %85 : vector<16x1xf32>
    %87 = vector.broadcast %86 : vector<16x1xf32> to vector<16x128xf32>
    %88 = arith.mulf %78, %87 : vector<16x128xf32>
    %89 = vector.broadcast %64 : vector<1x128xf32> to vector<16x128xf32>
    %90 = arith.mulf %89, %88 : vector<16x128xf32>
    %91 = vector.broadcast %65 : vector<1x128xf32> to vector<16x128xf32>
    %92 = arith.addf %90, %91 : vector<16x128xf32>
    %cst_60 = arith.constant 0.000000e+00 : f32
    %93 = vector.broadcast %cst_60 : f32 to vector<16x128xf32>
    %94 = arith.maximumf %92, %93 : vector<16x128xf32>
    %c0_61 = arith.constant 0 : index
    %c0_62 = arith.constant 0 : index
    %c0_63 = arith.constant 0 : index
    %95 = vector.load %arg1[%c0_61, %c0_62, %c0_63] : memref<1x16x128xf32, #tpu.memory_space<vmem>>, vector<1x16x128xf32>
    %96 = vector.shape_cast %95 : vector<1x16x128xf32> to vector<16x128xf32>
    %97 = arith.addf %96, %94 : vector<16x128xf32>
    %98 = vector.shape_cast %97 : vector<16x128xf32> to vector<1x16x128xf32>
    %c0_64 = arith.constant 0 : index
    %c0_65 = arith.constant 0 : index
    %c0_66 = arith.constant 0 : index
    %99 = vector.load %arg10[%c0_64, %c0_65, %c0_66] : memref<1x16x128xf32, #tpu.memory_space<vmem>>, vector<1x16x128xf32>
    tpu.vector_store %arg10[%c0_64, %c0_65, %c0_66], %98 {strides = array<i32>} : memref<1x16x128xf32, #tpu.memory_space<vmem>>, vector<1x16x128xf32>,
    return
  }
  func.func @transform_0(%arg0: i32) -> (i32, i32, i32) {
    %c0_i32 = arith.constant 0 : i32
    %c0_i32_0 = arith.constant 0 : i32
    %c0_i32_1 = arith.constant 0 : i32
    return %arg0, %c0_i32, %c0_i32_0 : i32, i32, i32
  }
  func.func @transform_1(%arg0: i32) -> (i32, i32) {
    %c0_i32 = arith.constant 0 : i32
    %c0_i32_0 = arith.constant 0 : i32
    %c0_i32_1 = arith.constant 0 : i32
    return %c0_i32, %c0_i32_0 : i32, i32
  }
  func.func @transform_2(%arg0: i32) -> (i32, i32) {
    %c0_i32 = arith.constant 0 : i32
    %c0_i32_0 = arith.constant 0 : i32
    %c0_i32_1 = arith.constant 0 : i32
    return %c0_i32, %c0_i32_0 : i32, i32
  }
  func.func @transform_3(%arg0: i32) -> (i32, i32) {
    %c0_i32 = arith.constant 0 : i32
    %c0_i32_0 = arith.constant 0 : i32
    %c0_i32_1 = arith.constant 0 : i32
    return %c0_i32, %c0_i32_0 : i32, i32
  }
  func.func @transform_4(%arg0: i32) -> (i32, i32) {
    %c0_i32 = arith.constant 0 : i32
    %c0_i32_0 = arith.constant 0 : i32
    %c0_i32_1 = arith.constant 0 : i32
    return %c0_i32, %c0_i32_0 : i32, i32
  }
  func.func @transform_5(%arg0: i32) -> (i32, i32) {
    %c0_i32 = arith.constant 0 : i32
    %c0_i32_0 = arith.constant 0 : i32
    %c0_i32_1 = arith.constant 0 : i32
    return %c0_i32, %c0_i32_0 : i32, i32
  }
  func.func @transform_6(%arg0: i32) -> (i32, i32) {
    %c0_i32 = arith.constant 0 : i32
    %c0_i32_0 = arith.constant 0 : i32
    %c0_i32_1 = arith.constant 0 : i32
    return %c0_i32, %c0_i32_0 : i32, i32
  }
  func.func @transform_7(%arg0: i32) -> (i32, i32) {
    %c0_i32 = arith.constant 0 : i32
    %c0_i32_0 = arith.constant 0 : i32
    %c0_i32_1 = arith.constant 0 : i32
    return %c0_i32, %c0_i32_0 : i32, i32
  }
  func.func @transform_8(%arg0: i32) -> (i32, i32) {
    %c0_i32 = arith.constant 0 : i32
    %c0_i32_0 = arith.constant 0 : i32
    %c0_i32_1 = arith.constant 0 : i32
    return %c0_i32, %c0_i32_0 : i32, i32
  }
  func.func @transform_9(%arg0: i32) -> (i32, i32, i32) {
    %c0_i32 = arith.constant 0 : i32
    %c0_i32_0 = arith.constant 0 : i32
    %c0_i32_1 = arith.constant 0 : i32
    return %arg0, %c0_i32, %c0_i32_0 : i32, i32, i32
  }
}

module attributes {stable_mosaic.version = 11 : i64} {
  func.func @residual_block_kernel(%arg0: i32, %arg1: memref<1x16x128xf32, #tpu.memory_space<vmem>>, %arg2: memref<384x128xbf16, #tpu.memory_space<vmem>>, %arg3: memref<1x128xf32, #tpu.memory_space<vmem>>, %arg4: memref<1x128xf32, #tpu.memory_space<vmem>>, %arg5: memref<1x128xf32, #tpu.memory_space<vmem>>, %arg6: memref<384x128xbf16, #tpu.memory_space<vmem>>, %arg7: memref<1x128xf32, #tpu.memory_space<vmem>>, %arg8: memref<1x128xf32, #tpu.memory_space<vmem>>, %arg9: memref<1x128xf32, #tpu.memory_space<vmem>>, %arg10: memref<1x16x128xf32, #tpu.memory_space<vmem>>, %arg11: memref<1x24x128xbf16, #tpu.memory_space<vmem>>, %arg12: memref<1x24x128xbf16, #tpu.memory_space<vmem>>) attributes {dimension_semantics = [#tpu.dimension_semantics<parallel>], iteration_bounds = array<i64: 2>, scalar_prefetch = 0 : i64, scratch_operands = 2 : i64, tpu.core_type = #tpu.core_type<tc>, window_params = [{transform_indices = @transform_0, window_bounds = array<i64: 1, 16, 128>}, {pipeline_mode = #tpu.pipeline_mode<synchronous>, transform_indices = @transform_1, window_bounds = array<i64: 384, 128>}, {pipeline_mode = #tpu.pipeline_mode<synchronous>, transform_indices = @transform_2, window_bounds = array<i64: 1, 128>}, {pipeline_mode = #tpu.pipeline_mode<synchronous>, transform_indices = @transform_3, window_bounds = array<i64: 1, 128>}, {pipeline_mode = #tpu.pipeline_mode<synchronous>, transform_indices = @transform_4, window_bounds = array<i64: 1, 128>}, {pipeline_mode = #tpu.pipeline_mode<synchronous>, transform_indices = @transform_5, window_bounds = array<i64: 384, 128>}, {pipeline_mode = #tpu.pipeline_mode<synchronous>, transform_indices = @transform_6, window_bounds = array<i64: 1, 128>}, {pipeline_mode = #tpu.pipeline_mode<synchronous>, transform_indices = @transform_7, window_bounds = array<i64: 1, 128>}, {pipeline_mode = #tpu.pipeline_mode<synchronous>, transform_indices = @transform_8, window_bounds = array<i64: 1, 128>}, {transform_indices = @transform_9, window_bounds = array<i64: 1, 16, 128>}]} {
    %cst = arith.constant 0.000000e+00 : bf16
    %0 = vector.broadcast %cst : bf16 to vector<1x8x128xbf16>
    %c0 = arith.constant 0 : index
    %c0_0 = arith.constant 0 : index
    %c0_1 = arith.constant 0 : index
    %1 = vector.load %arg11[%c0, %c0_0, %c0_1] : memref<1x24x128xbf16, #tpu.memory_space<vmem>>, vector<1x8x128xbf16>
    tpu.vector_store %arg11[%c0, %c0_0, %c0_1], %0 {strides = array<i32>} : memref<1x24x128xbf16, #tpu.memory_space<vmem>>, vector<1x8x128xbf16>,
    %c0_2 = arith.constant 0 : index
    %c0_3 = arith.constant 0 : index
    %c0_4 = arith.constant 0 : index
    %2 = vector.load %arg12[%c0_2, %c0_3, %c0_4] : memref<1x24x128xbf16, #tpu.memory_space<vmem>>, vector<1x8x128xbf16>
    tpu.vector_store %arg12[%c0_2, %c0_3, %c0_4], %0 {strides = array<i32>} : memref<1x24x128xbf16, #tpu.memory_space<vmem>>, vector<1x8x128xbf16>,
    %c0_5 = arith.constant 0 : index
    %c0_6 = arith.constant 0 : index
    %c0_7 = arith.constant 0 : index
    %3 = vector.load %arg1[%c0_5, %c0_6, %c0_7] : memref<1x16x128xf32, #tpu.memory_space<vmem>>, vector<1x16x128xf32>
    %4 = arith.truncf %3 : vector<1x16x128xf32> to vector<1x16x128xbf16>
    %c0_8 = arith.constant 0 : index
    %c8 = arith.constant 8 : index
    %c0_9 = arith.constant 0 : index
    %5 = vector.load %arg11[%c0_8, %c8, %c0_9] : memref<1x24x128xbf16, #tpu.memory_space<vmem>>, vector<1x16x128xbf16>
    tpu.vector_store %arg11[%c0_8, %c8, %c0_9], %4 {strides = array<i32>} : memref<1x24x128xbf16, #tpu.memory_space<vmem>>, vector<1x16x128xbf16>,
    %c0_10 = arith.constant 0 : index
    %c6 = arith.constant 6 : index
    %c0_11 = arith.constant 0 : index
    %6 = vector.load %arg11[%c0_10, %c6, %c0_11] : memref<1x24x128xbf16, #tpu.memory_space<vmem>>, vector<1x16x128xbf16>
    %7 = vector.shape_cast %6 : vector<1x16x128xbf16> to vector<16x128xbf16>
    %c0_12 = arith.constant 0 : index
    %c7 = arith.constant 7 : index
    %c0_13 = arith.constant 0 : index
    %8 = vector.load %arg11[%c0_12, %c7, %c0_13] : memref<1x24x128xbf16, #tpu.memory_space<vmem>>, vector<1x16x128xbf16>
    %9 = vector.shape_cast %8 : vector<1x16x128xbf16> to vector<16x128xbf16>
    %c0_14 = arith.constant 0 : index
    %c8_15 = arith.constant 8 : index
    %c0_16 = arith.constant 0 : index
    %10 = vector.load %arg11[%c0_14, %c8_15, %c0_16] : memref<1x24x128xbf16, #tpu.memory_space<vmem>>, vector<1x16x128xbf16>
    %11 = vector.shape_cast %10 : vector<1x16x128xbf16> to vector<16x128xbf16>
    %12 = tpu.concatenate %7, %9, %11 in 1 : vector<16x128xbf16>, vector<16x128xbf16>, vector<16x128xbf16> -> vector<16x384xbf16>
    %c0_17 = arith.constant 0 : index
    %c0_18 = arith.constant 0 : index
    %13 = vector.load %arg2[%c0_17, %c0_18] : memref<384x128xbf16, #tpu.memory_space<vmem>>, vector<384x128xbf16>
    %cst_19 = arith.constant dense<0.000000e+00> : vector<16x128xf32>
    %14 = tpu.matmul %12, %13, %cst_19 {dimension_numbers = #tpu.dot_dimension_numbers<[1], [0], [0], [1], [0, 0, 1, 1], [], []>} : vector<16x384xbf16>, vector<384x128xbf16>, vector<16x128xf32> -> vector<16x128xf32>
    %c0_20 = arith.constant 0 : index
    %c0_21 = arith.constant 0 : index
    %15 = vector.load %arg3[%c0_20, %c0_21] : memref<1x128xf32, #tpu.memory_space<vmem>>, vector<1x128xf32>
    %16 = vector.broadcast %15 : vector<1x128xf32> to vector<16x128xf32>
    %17 = arith.addf %14, %16 : vector<16x128xf32>
    %c0_22 = arith.constant 0 : index
    %c0_23 = arith.constant 0 : index
    %18 = vector.load %arg4[%c0_22, %c0_23] : memref<1x128xf32, #tpu.memory_space<vmem>>, vector<1x128xf32>
    %c0_24 = arith.constant 0 : index
    %c0_25 = arith.constant 0 : index
    %19 = vector.load %arg5[%c0_24, %c0_25] : memref<1x128xf32, #tpu.memory_space<vmem>>, vector<1x128xf32>
    %cst_26 = arith.constant dense<0.000000e+00> : vector<16xf32>
    %20 = vector.multi_reduction <add>, %17, %cst_26 [1] : vector<16x128xf32> to vector<16xf32>
    %21 = vector.shape_cast %20 : vector<16xf32> to vector<16x1xf32>
    %cst_27 = arith.constant 3.125000e-02 : f32
    %22 = vector.broadcast %cst_27 : f32 to vector<16x1xf32>
    %23 = arith.mulf %21, %22 : vector<16x1xf32>
    %24 = vector.broadcast %23 : vector<16x1xf32> to vector<16x128xf32>
    %25 = arith.subf %17, %24 : vector<16x128xf32>
    %26 = tpu.iota {dimensions = array<i32: 1>} : vector<1x128xi32>
    %c32_i32 = arith.constant 32 : i32
    %27 = vector.broadcast %c32_i32 : i32 to vector<1x128xi32>
    %28 = arith.cmpi slt, %26, %27 : vector<1x128xi32>
    %cst_28 = arith.constant 0.000000e+00 : f32
    %29 = vector.shape_cast %28 : vector<1x128xi1> to vector<1x128xi1>
    %30 = vector.broadcast %29 : vector<1x128xi1> to vector<16x128xi1>
    %31 = vector.broadcast %cst_28 : f32 to vector<16x128xf32>
    %32 = arith.select %30, %25, %31 : vector<16x128xi1>, vector<16x128xf32>
    %33 = arith.mulf %32, %32 : vector<16x128xf32>
    %cst_29 = arith.constant dense<0.000000e+00> : vector<16xf32>
    %34 = vector.multi_reduction <add>, %33, %cst_29 [1] : vector<16x128xf32> to vector<16xf32>
    %35 = vector.shape_cast %34 : vector<16xf32> to vector<16x1xf32>
    %cst_30 = arith.constant 0.0322580636 : f32
    %36 = vector.broadcast %cst_30 : f32 to vector<16x1xf32>
    %37 = arith.mulf %35, %36 : vector<16x1xf32>
    %cst_31 = arith.constant 9.99999993E-9 : f32
    %38 = vector.broadcast %cst_31 : f32 to vector<16x1xf32>
    %39 = arith.addf %37, %38 : vector<16x1xf32>
    %40 = math.rsqrt %39 : vector<16x1xf32>
    %41 = vector.broadcast %40 : vector<16x1xf32> to vector<16x128xf32>
    %42 = arith.mulf %32, %41 : vector<16x128xf32>
    %43 = vector.broadcast %18 : vector<1x128xf32> to vector<16x128xf32>
    %44 = arith.mulf %43, %42 : vector<16x128xf32>
    %45 = vector.broadcast %19 : vector<1x128xf32> to vector<16x128xf32>
    %46 = arith.addf %44, %45 : vector<16x128xf32>
    %cst_32 = arith.constant 0.000000e+00 : f32
    %47 = vector.broadcast %cst_32 : f32 to vector<16x128xf32>
    %48 = arith.maximumf %46, %47 : vector<16x128xf32>
    %49 = arith.truncf %48 : vector<16x128xf32> to vector<16x128xbf16>
    %50 = vector.shape_cast %49 : vector<16x128xbf16> to vector<1x16x128xbf16>
    %c0_33 = arith.constant 0 : index
    %c8_34 = arith.constant 8 : index
    %c0_35 = arith.constant 0 : index
    %51 = vector.load %arg12[%c0_33, %c8_34, %c0_35] : memref<1x24x128xbf16, #tpu.memory_space<vmem>>, vector<1x16x128xbf16>
    tpu.vector_store %arg12[%c0_33, %c8_34, %c0_35], %50 {strides = array<i32>} : memref<1x24x128xbf16, #tpu.memory_space<vmem>>, vector<1x16x128xbf16>,
    %c0_36 = arith.constant 0 : index
    %c4 = arith.constant 4 : index
    %c0_37 = arith.constant 0 : index
    %52 = vector.load %arg12[%c0_36, %c4, %c0_37] : memref<1x24x128xbf16, #tpu.memory_space<vmem>>, vector<1x16x128xbf16>
    %53 = vector.shape_cast %52 : vector<1x16x128xbf16> to vector<16x128xbf16>
    %c0_38 = arith.constant 0 : index
    %c6_39 = arith.constant 6 : index
    %c0_40 = arith.constant 0 : index
    %54 = vector.load %arg12[%c0_38, %c6_39, %c0_40] : memref<1x24x128xbf16, #tpu.memory_space<vmem>>, vector<1x16x128xbf16>
    %55 = vector.shape_cast %54 : vector<1x16x128xbf16> to vector<16x128xbf16>
    %c0_41 = arith.constant 0 : index
    %c8_42 = arith.constant 8 : index
    %c0_43 = arith.constant 0 : index
    %56 = vector.load %arg12[%c0_41, %c8_42, %c0_43] : memref<1x24x128xbf16, #tpu.memory_space<vmem>>, vector<1x16x128xbf16>
    %57 = vector.shape_cast %56 : vector<1x16x128xbf16> to vector<16x128xbf16>
    %58 = tpu.concatenate %53, %55, %57 in 1 : vector<16x128xbf16>, vector<16x128xbf16>, vector<16x128xbf16> -> vector<16x384xbf16>
    %c0_44 = arith.constant 0 : index
    %c0_45 = arith.constant 0 : index
    %59 = vector.load %arg6[%c0_44, %c0_45] : memref<384x128xbf16, #tpu.memory_space<vmem>>, vector<384x128xbf16>
    %cst_46 = arith.constant dense<0.000000e+00> : vector<16x128xf32>
    %60 = tpu.matmul %58, %59, %cst_46 {dimension_numbers = #tpu.dot_dimension_numbers<[1], [0], [0], [1], [0, 0, 1, 1], [], []>} : vector<16x384xbf16>, vector<384x128xbf16>, vector<16x128xf32> -> vector<16x128xf32>
    %c0_47 = arith.constant 0 : index
    %c0_48 = arith.constant 0 : index
    %61 = vector.load %arg7[%c0_47, %c0_48] : memref<1x128xf32, #tpu.memory_space<vmem>>, vector<1x128xf32>
    %62 = vector.broadcast %61 : vector<1x128xf32> to vector<16x128xf32>
    %63 = arith.addf %60, %62 : vector<16x128xf32>
    %c0_49 = arith.constant 0 : index
    %c0_50 = arith.constant 0 : index
    %64 = vector.load %arg8[%c0_49, %c0_50] : memref<1x128xf32, #tpu.memory_space<vmem>>, vector<1x128xf32>
    %c0_51 = arith.constant 0 : index
    %c0_52 = arith.constant 0 : index
    %65 = vector.load %arg9[%c0_51, %c0_52] : memref<1x128xf32, #tpu.memory_space<vmem>>, vector<1x128xf32>
    %cst_53 = arith.constant dense<0.000000e+00> : vector<16xf32>
    %66 = vector.multi_reduction <add>, %63, %cst_53 [1] : vector<16x128xf32> to vector<16xf32>
    %67 = vector.shape_cast %66 : vector<16xf32> to vector<16x1xf32>
    %cst_54 = arith.constant 3.125000e-02 : f32
    %68 = vector.broadcast %cst_54 : f32 to vector<16x1xf32>
    %69 = arith.mulf %67, %68 : vector<16x1xf32>
    %70 = vector.broadcast %69 : vector<16x1xf32> to vector<16x128xf32>
    %71 = arith.subf %63, %70 : vector<16x128xf32>
    %72 = tpu.iota {dimensions = array<i32: 1>} : vector<1x128xi32>
    %c32_i32_55 = arith.constant 32 : i32
    %73 = vector.broadcast %c32_i32_55 : i32 to vector<1x128xi32>
    %74 = arith.cmpi slt, %72, %73 : vector<1x128xi32>
    %cst_56 = arith.constant 0.000000e+00 : f32
    %75 = vector.shape_cast %74 : vector<1x128xi1> to vector<1x128xi1>
    %76 = vector.broadcast %75 : vector<1x128xi1> to vector<16x128xi1>
    %77 = vector.broadcast %cst_56 : f32 to vector<16x128xf32>
    %78 = arith.select %76, %71, %77 : vector<16x128xi1>, vector<16x128xf32>
    %79 = arith.mulf %78, %78 : vector<16x128xf32>
    %cst_57 = arith.constant dense<0.000000e+00> : vector<16xf32>
    %80 = vector.multi_reduction <add>, %79, %cst_57 [1] : vector<16x128xf32> to vector<16xf32>
    %81 = vector.shape_cast %80 : vector<16xf32> to vector<16x1xf32>
    %cst_58 = arith.constant 0.0322580636 : f32
    %82 = vector.broadcast %cst_58 : f32 to vector<16x1xf32>
    %83 = arith.mulf %81, %82 : vector<16x1xf32>
    %cst_59 = arith.constant 9.99999993E-9 : f32
    %84 = vector.broadcast %cst_59 : f32 to vector<16x1xf32>
    %85 = arith.addf %83, %84 : vector<16x1xf32>
    %86 = math.rsqrt %85 : vector<16x1xf32>
    %87 = vector.broadcast %86 : vector<16x1xf32> to vector<16x128xf32>
    %88 = arith.mulf %78, %87 : vector<16x128xf32>
    %89 = vector.broadcast %64 : vector<1x128xf32> to vector<16x128xf32>
    %90 = arith.mulf %89, %88 : vector<16x128xf32>
    %91 = vector.broadcast %65 : vector<1x128xf32> to vector<16x128xf32>
    %92 = arith.addf %90, %91 : vector<16x128xf32>
    %cst_60 = arith.constant 0.000000e+00 : f32
    %93 = vector.broadcast %cst_60 : f32 to vector<16x128xf32>
    %94 = arith.maximumf %92, %93 : vector<16x128xf32>
    %c0_61 = arith.constant 0 : index
    %c0_62 = arith.constant 0 : index
    %c0_63 = arith.constant 0 : index
    %95 = vector.load %arg1[%c0_61, %c0_62, %c0_63] : memref<1x16x128xf32, #tpu.memory_space<vmem>>, vector<1x16x128xf32>
    %96 = vector.shape_cast %95 : vector<1x16x128xf32> to vector<16x128xf32>
    %97 = arith.addf %96, %94 : vector<16x128xf32>
    %98 = vector.shape_cast %97 : vector<16x128xf32> to vector<1x16x128xf32>
    %c0_64 = arith.constant 0 : index
    %c0_65 = arith.constant 0 : index
    %c0_66 = arith.constant 0 : index
    %99 = vector.load %arg10[%c0_64, %c0_65, %c0_66] : memref<1x16x128xf32, #tpu.memory_space<vmem>>, vector<1x16x128xf32>
    tpu.vector_store %arg10[%c0_64, %c0_65, %c0_66], %98 {strides = array<i32>} : memref<1x16x128xf32, #tpu.memory_space<vmem>>, vector<1x16x128xf32>,
    return
  }
  func.func @transform_0(%arg0: i32) -> (i32, i32, i32) {
    %c0_i32 = arith.constant 0 : i32
    %c0_i32_0 = arith.constant 0 : i32
    %c0_i32_1 = arith.constant 0 : i32
    return %arg0, %c0_i32, %c0_i32_0 : i32, i32, i32
  }
  func.func @transform_1(%arg0: i32) -> (i32, i32) {
    %c0_i32 = arith.constant 0 : i32
    %c0_i32_0 = arith.constant 0 : i32
    %c0_i32_1 = arith.constant 0 : i32
    return %c0_i32, %c0_i32_0 : i32, i32
  }
  func.func @transform_2(%arg0: i32) -> (i32, i32) {
    %c0_i32 = arith.constant 0 : i32
    %c0_i32_0 = arith.constant 0 : i32
    %c0_i32_1 = arith.constant 0 : i32
    return %c0_i32, %c0_i32_0 : i32, i32
  }
  func.func @transform_3(%arg0: i32) -> (i32, i32) {
    %c0_i32 = arith.constant 0 : i32
    %c0_i32_0 = arith.constant 0 : i32
    %c0_i32_1 = arith.constant 0 : i32
    return %c0_i32, %c0_i32_0 : i32, i32
  }
  func.func @transform_4(%arg0: i32) -> (i32, i32) {
    %c0_i32 = arith.constant 0 : i32
    %c0_i32_0 = arith.constant 0 : i32
    %c0_i32_1 = arith.constant 0 : i32
    return %c0_i32, %c0_i32_0 : i32, i32
  }
  func.func @transform_5(%arg0: i32) -> (i32, i32) {
    %c0_i32 = arith.constant 0 : i32
    %c0_i32_0 = arith.constant 0 : i32
    %c0_i32_1 = arith.constant 0 : i32
    return %c0_i32, %c0_i32_0 : i32, i32
  }
  func.func @transform_6(%arg0: i32) -> (i32, i32) {
    %c0_i32 = arith.constant 0 : i32
    %c0_i32_0 = arith.constant 0 : i32
    %c0_i32_1 = arith.constant 0 : i32
    return %c0_i32, %c0_i32_0 : i32, i32
  }
  func.func @transform_7(%arg0: i32) -> (i32, i32) {
    %c0_i32 = arith.constant 0 : i32
    %c0_i32_0 = arith.constant 0 : i32
    %c0_i32_1 = arith.constant 0 : i32
    return %c0_i32, %c0_i32_0 : i32, i32
  }
  func.func @transform_8(%arg0: i32) -> (i32, i32) {
    %c0_i32 = arith.constant 0 : i32
    %c0_i32_0 = arith.constant 0 : i32
    %c0_i32_1 = arith.constant 0 : i32
    return %c0_i32, %c0_i32_0 : i32, i32
  }
  func.func @transform_9(%arg0: i32) -> (i32, i32, i32) {
    %c0_i32 = arith.constant 0 : i32
    %c0_i32_0 = arith.constant 0 : i32
    %c0_i32_1 = arith.constant 0 : i32
    return %arg0, %c0_i32, %c0_i32_0 : i32, i32, i32
  }
}

</mosaic_0001>

<llo_original>
// kernel: tpu_custom_call.1
$region0: #{tpu_custom_call.1}
  #allocation0 [shape = 'u32[]', space=smem, size = 0x4, offset = 0x4, fixed_abs, tag = 'smem constant byte address 0x4 - core index']
  #allocation1 [shape = 'u32[144,128]{1,0:T(1,128)}', space=vmem, size = 0x12000, scoped, tag = 'internal scratch']
  #allocation2 [shape = 'bf16[1,24,128]{2,1,0:T(8,128)(2,1)}', space=vmem, size = 0x1800, scoped, tag = 'scratch operand']
  #allocation3 [shape = 'bf16[1,24,128]{2,1,0:T(8,128)(2,1)}', space=vmem, size = 0x1800, scoped, tag = 'scratch operand']
  %s0 = inlined_call_operand.hbm [shape: f32[2,16,128], index: 0, kind: input, shape index: {}]
  %s1 = inlined_call_operand.hbm [shape: bf16[384,128], index: 1, kind: input, shape index: {}]
  %s2 = inlined_call_operand.vmem [shape: f32[1,128], index: 2, kind: input, shape index: {}]
  %s3 = inlined_call_operand.vmem [shape: f32[1,128], index: 3, kind: input, shape index: {}]
  %s4 = inlined_call_operand.vmem [shape: f32[1,128], index: 4, kind: input, shape index: {}]
  %s5 = inlined_call_operand.hbm [shape: bf16[384,128], index: 5, kind: input, shape index: {}]
  %s6 = inlined_call_operand.vmem [shape: f32[1,128], index: 6, kind: input, shape index: {}]
  %s7 = inlined_call_operand.vmem [shape: f32[1,128], index: 7, kind: input, shape index: {}]
  %s8 = inlined_call_operand.vmem [shape: f32[1,128], index: 8, kind: input, shape index: {}]
  %s9 = inlined_call_operand.hbm [shape: f32[2,16,128], index: 9, kind: output, shape index: {}]
  %s10 = sld [smem:[#allocation0]]
  $region81: #{tpu_custom_call.1} parent=0
    _
  %s12 = ssub.s32 1, %s10
  %s13 = scalar_select 0, %s12, %s10
  $region1: #{tpu_custom_call.1} parent=0
    #allocation4 [shape = 'u8[16384]{0}', space=vmem, size = 0x4000, scoped, tag = 'input window, operand 0']
    #allocation5 [shape = 's32[2]{0}', space=sflag, size = 0x8, scoped, tag = 'scoped memory for tpu_custom_call.1']
    #allocation6 [shape = 's32[2]{0}', space=sflag, size = 0x8, scoped, tag = 'scoped memory for tpu_custom_call.1']
    #allocation7 [shape = 'u8[98304]{0}', space=vmem, size = 0x18000, scoped, tag = 'input window, operand 1, single buffered']
    #allocation8 [shape = 's32[1]{0}', space=sflag, size = 0x4, scoped, tag = 'scoped memory for tpu_custom_call.1']
    #allocation9 [shape = 'u8[98304]{0}', space=vmem, size = 0x18000, scoped, tag = 'input window, operand 5, single buffered']
    #allocation10 [shape = 'u8[16384]{0}', space=vmem, size = 0x4000, scoped, tag = 'output window, operand 0']
    %14 = vsyncpa [#allocation5], 0
    %s15 = scalar_lea.sflag [#allocation5], 1
    %16 = vsyncpa %s15, 0
    %17 = vsyncpa [#allocation8], 0
    %18 = vsyncpa [#allocation6], 0
    %s19 = scalar_lea.sflag [#allocation6], 1
    %20 = vsyncpa %s19, 0
    loop: start=0, step=1, limit=4
    $region2: #{tpu_custom_call.1} parent=1 // loop_pre_header
      _
    $region3: #{tpu_custom_call.1} parent=1 // loop_header
      %s22 = sphi 0, %s26
      %p23 = scmp.ge.s32.totalorder %s22, 4
      %s32 = sphi 0, %s34
      %s35 = sphi 0, %s32
      %s36 = sphi 0, %s35
      %s52 = sphi 0, %s36
      %s56 = sphi 0, %s56
      %s58 = sphi 0, %s56
      %s59 = sphi 0, %s58
      %s73 = sphi 0, %s59
      %s77 = sphi 0, %s77
      %s79 = sphi 0, %s77
      %s80 = sphi 0, %s79
      %s94 = sphi 0, %s80
      %s98 = sphi 0, %s98
      %s100 = sphi 0, %s98
      %s101 = sphi 0, %s100
      %s115 = sphi 0, %s101
      %s119 = sphi 0, %s119
      %s121 = sphi 0, %s119
      %s122 = sphi 0, %s121
      %s136 = sphi 0, %s122
      %s140 = sphi 0, %s140
      %s142 = sphi 0, %s140
      %s143 = sphi 0, %s142
      %s157 = sphi 0, %s143
      %s161 = sphi 0, %s161
      %s163 = sphi 0, %s161
      %s164 = sphi 0, %s163
      %s178 = sphi 0, %s164
      %s182 = sphi 0, %s182
      %s184 = sphi 0, %s182
      %s185 = sphi 0, %s184
      %s199 = sphi 0, %s185
      %s203 = sphi 0, %s203
      %s205 = sphi 0, %s203
      %s206 = sphi 0, %s205
      %s220 = sphi 0, %s206
      %s226 = sphi 0, %s228
      %s229 = sphi 0, %s226
      %s230 = sphi 0, %s229
      %s246 = sphi 0, %s230
    $region4: #{tpu_custom_call.1} parent=1 // loop_header_branch
      %25 = sbr.rel (%p23) target = $region8
    $region5: #{tpu_custom_call.1} parent=1 // loop_body
      %s27 = ssub.s32 %s22, 1
      %s28 = ssub.s32 %s22, 2
      %s29 = sadd.s32 %s22, 1
      %s30 = ssub.s32 %s22, %s29
      %p31 = scmp.eq.s32.totalorder %s30, 0
      %s33 = sadd.s32 %s32, 1
      %s34 = scalar_select %p31, %s32, %s33
      %p37 = pneg %p31
      %p38 = scmp.eq.s32.totalorder %s22, 1
      %p39 = por %p37, %p38
      %p40 = scmp.ne.s32.totalorder %s32, %s35
      %p41 = scmp.eq.s32.totalorder %s22, 0
      %p42 = por %p40, %p41
      %p43 = scmp.ne.s32.totalorder %s32, %s35
      %p44 = scmp.eq.s32.totalorder %s27, 1
      %p45 = por %p43, %p44
      %p46 = scmp.ne.s32.totalorder %s35, %s36
      %p47 = scmp.eq.s32.totalorder %s27, 0
      %p48 = por %p46, %p47
      %p49 = scmp.ne.s32.totalorder %s35, %s36
      %p50 = scmp.eq.s32.totalorder %s28, 1
      %p51 = por %p49, %p50
      %p53 = scmp.ne.s32.totalorder %s36, %s52
      %p54 = scmp.eq.s32.totalorder %s28, 0
      %p55 = por %p53, %p54
      %s57 = sadd.s32 %s56, 1
      %p60 = scmp.eq.s32.totalorder %s22, 1
      %p61 = scmp.ne.s32.totalorder %s56, %s58
      %p62 = scmp.eq.s32.totalorder %s22, 0
      %p63 = por %p61, %p62
      %p64 = scmp.ne.s32.totalorder %s56, %s58
      %p65 = scmp.eq.s32.totalorder %s27, 1
      %p66 = por %p64, %p65
      %p67 = scmp.ne.s32.totalorder %s58, %s59
      %p68 = scmp.eq.s32.totalorder %s27, 0
      %p69 = por %p67, %p68
      %p70 = scmp.ne.s32.totalorder %s58, %s59
      %p71 = scmp.eq.s32.totalorder %s28, 1
      %p72 = por %p70, %p71
      %p74 = scmp.ne.s32.totalorder %s59, %s73
      %p75 = scmp.eq.s32.totalorder %s28, 0
      %p76 = por %p74, %p75
      %s78 = sadd.s32 %s77, 1
      %p81 = scmp.eq.s32.totalorder %s22, 1
      %p82 = scmp.ne.s32.totalorder %s77, %s79
      %p83 = scmp.eq.s32.totalorder %s22, 0
      %p84 = por %p82, %p83
      %p85 = scmp.ne.s32.totalorder %s77, %s79
      %p86 = scmp.eq.s32.totalorder %s27, 1
      %p87 = por %p85, %p86
      %p88 = scmp.ne.s32.totalorder %s79, %s80
      %p89 = scmp.eq.s32.totalorder %s27, 0
      %p90 = por %p88, %p89
      %p91 = scmp.ne.s32.totalorder %s79, %s80
      %p92 = scmp.eq.s32.totalorder %s28, 1
      %p93 = por %p91, %p92
      %p95 = scmp.ne.s32.totalorder %s80, %s94
      %p96 = scmp.eq.s32.totalorder %s28, 0
      %p97 = por %p95, %p96
      %s99 = sadd.s32 %s98, 1
      %p102 = scmp.eq.s32.totalorder %s22, 1
      %p103 = scmp.ne.s32.totalorder %s98, %s100
      %p104 = scmp.eq.s32.totalorder %s22, 0
      %p105 = por %p103, %p104
      %p106 = scmp.ne.s32.totalorder %s98, %s100
      %p107 = scmp.eq.s32.totalorder %s27, 1
      %p108 = por %p106, %p107
      %p109 = scmp.ne.s32.totalorder %s100, %s101
      %p110 = scmp.eq.s32.totalorder %s27, 0
      %p111 = por %p109, %p110
      %p112 = scmp.ne.s32.totalorder %s100, %s101
      %p113 = scmp.eq.s32.totalorder %s28, 1
      %p114 = por %p112, %p113
      %p116 = scmp.ne.s32.totalorder %s101, %s115
      %p117 = scmp.eq.s32.totalorder %s28, 0
      %p118 = por %p116, %p117
      %s120 = sadd.s32 %s119, 1
      %p123 = scmp.eq.s32.totalorder %s22, 1
      %p124 = scmp.ne.s32.totalorder %s119, %s121
      %p125 = scmp.eq.s32.totalorder %s22, 0
      %p126 = por %p124, %p125
      %p127 = scmp.ne.s32.totalorder %s119, %s121
      %p128 = scmp.eq.s32.totalorder %s27, 1
      %p129 = por %p127, %p128
      %p130 = scmp.ne.s32.totalorder %s121, %s122
      %p131 = scmp.eq.s32.totalorder %s27, 0
      %p132 = por %p130, %p131
      %p133 = scmp.ne.s32.totalorder %s121, %s122
      %p134 = scmp.eq.s32.totalorder %s28, 1
      %p135 = por %p133, %p134
      %p137 = scmp.ne.s32.totalorder %s122, %s136
      %p138 = scmp.eq.s32.totalorder %s28, 0
      %p139 = por %p137, %p138
      %s141 = sadd.s32 %s140, 1
      %p144 = scmp.eq.s32.totalorder %s22, 1
      %p145 = scmp.ne.s32.totalorder %s140, %s142
      %p146 = scmp.eq.s32.totalorder %s22, 0
      %p147 = por %p145, %p146
      %p148 = scmp.ne.s32.totalorder %s140, %s142
      %p149 = scmp.eq.s32.totalorder %s27, 1
      %p150 = por %p148, %p149
      %p151 = scmp.ne.s32.totalorder %s142, %s143
      %p152 = scmp.eq.s32.totalorder %s27, 0
      %p153 = por %p151, %p152
      %p154 = scmp.ne.s32.totalorder %s142, %s143
      %p155 = scmp.eq.s32.totalorder %s28, 1
      %p156 = por %p154, %p155
      %p158 = scmp.ne.s32.totalorder %s143, %s157
      %p159 = scmp.eq.s32.totalorder %s28, 0
      %p160 = por %p158, %p159
      %s162 = sadd.s32 %s161, 1
      %p165 = scmp.eq.s32.totalorder %s22, 1
      %p166 = scmp.ne.s32.totalorder %s161, %s163
      %p167 = scmp.eq.s32.totalorder %s22, 0
      %p168 = por %p166, %p167
      %p169 = scmp.ne.s32.totalorder %s161, %s163
      %p170 = scmp.eq.s32.totalorder %s27, 1
      %p171 = por %p169, %p170
      %p172 = scmp.ne.s32.totalorder %s163, %s164
      %p173 = scmp.eq.s32.totalorder %s27, 0
      %p174 = por %p172, %p173
      %p175 = scmp.ne.s32.totalorder %s163, %s164
      %p176 = scmp.eq.s32.totalorder %s28, 1
      %p177 = por %p175, %p176
      %p179 = scmp.ne.s32.totalorder %s164, %s178
      %p180 = scmp.eq.s32.totalorder %s28, 0
      %p181 = por %p179, %p180
      %s183 = sadd.s32 %s182, 1
      %p186 = scmp.eq.s32.totalorder %s22, 1
      %p187 = scmp.ne.s32.totalorder %s182, %s184
      %p188 = scmp.eq.s32.totalorder %s22, 0
      %p189 = por %p187, %p188
      %p190 = scmp.ne.s32.totalorder %s182, %s184
      %p191 = scmp.eq.s32.totalorder %s27, 1
      %p192 = por %p190, %p191
      %p193 = scmp.ne.s32.totalorder %s184, %s185
      %p194 = scmp.eq.s32.totalorder %s27, 0
      %p195 = por %p193, %p194
      %p196 = scmp.ne.s32.totalorder %s184, %s185
      %p197 = scmp.eq.s32.totalorder %s28, 1
      %p198 = por %p196, %p197
      %p200 = scmp.ne.s32.totalorder %s185, %s199
      %p201 = scmp.eq.s32.totalorder %s28, 0
      %p202 = por %p200, %p201
      %s204 = sadd.s32 %s203, 1
      %p207 = scmp.eq.s32.totalorder %s22, 1
      %p208 = scmp.ne.s32.totalorder %s203, %s205
      %p209 = scmp.eq.s32.totalorder %s22, 0
      %p210 = por %p208, %p209
      %p211 = scmp.ne.s32.totalorder %s203, %s205
      %p212 = scmp.eq.s32.totalorder %s27, 1
      %p213 = por %p211, %p212
      %p214 = scmp.ne.s32.totalorder %s205, %s206
      %p215 = scmp.eq.s32.totalorder %s27, 0
      %p216 = por %p214, %p215
      %p217 = scmp.ne.s32.totalorder %s205, %s206
      %p218 = scmp.eq.s32.totalorder %s28, 1
      %p219 = por %p217, %p218
      %p221 = scmp.ne.s32.totalorder %s206, %s220
      %p222 = scmp.eq.s32.totalorder %s28, 0
      %p223 = por %p221, %p222
      %s224 = ssub.s32 %s22, %s29
      %p225 = scmp.eq.s32.totalorder %s224, 0
      %s227 = sadd.s32 %s226, 1
      %s228 = scalar_select %p225, %s226, %s227
      %p231 = pneg %p225
      %p232 = scmp.eq.s32.totalorder %s22, 1
      %p233 = por %p231, %p232
      %p234 = scmp.ne.s32.totalorder %s226, %s229
      %p235 = scmp.eq.s32.totalorder %s22, 0
      %p236 = por %p234, %p235
      %p237 = scmp.ne.s32.totalorder %s226, %s229
      %p238 = scmp.eq.s32.totalorder %s27, 1
      %p239 = por %p237, %p238
      %p240 = scmp.ne.s32.totalorder %s229, %s230
      %p241 = scmp.eq.s32.totalorder %s27, 0
      %p242 = por %p240, %p241
      %p243 = scmp.ne.s32.totalorder %s229, %s230
      %p244 = scmp.eq.s32.totalorder %s28, 1
      %p245 = por %p243, %p244
      %p247 = scmp.ne.s32.totalorder %s230, %s246
      %p248 = scmp.eq.s32.totalorder %s28, 0
      %p249 = por %p247, %p248
      %p250 = scmp.le.s32.totalorder 1, %s22
      %p251 = scmp.lt.s32.totalorder %s22, 3
      %p252 = pnand %p250, %p251
      %p253 = pneg %p252
      // Predicated region
      $region9: #{tpu_custom_call.1} parent=5 // pred_check
        _
      $region10: #{tpu_custom_call.1} parent=5 // pred_check_branch
        %255 = sbr.rel (%p252) target = $region12
      $region11: #{tpu_custom_call.1} parent=5 // pred_region
        %s256 = ssub.s32 %s22, 1
        // Predicated region
        $region13: #{tpu_custom_call.1} parent=11 // pred_check
          %p257 = pneg %p69
        $region14: #{tpu_custom_call.1} parent=11 // pred_check_branch
          %259 = sbr.rel (%p257) target = $region16
        $region15: #{tpu_custom_call.1} parent=11 // pred_region
          %s261 = ssub.s32 3072, 3072
          %262 = vsyncadd [#allocation8], %s261
          %s263 = sshll.u32 [#allocation7], 4
          %s264 = int_to_ptr.vmem [resolvable:$true] %s263
          %269 = dma.hbm_to_vmem [thread:$0]  %s1, 3072, %s264, [#allocation8], 64, 64, 4
        $region16: #{tpu_custom_call.1} parent=11 // pred_fallthru
          _
        // Predicated region
        $region17: #{tpu_custom_call.1} parent=11 // pred_check
          %p270 = pneg %p90
        $region18: #{tpu_custom_call.1} parent=11 // pred_check_branch
          %272 = sbr.rel (%p270) target = $region20
        $region19: #{tpu_custom_call.1} parent=11 // pred_region
          _
        $region20: #{tpu_custom_call.1} parent=11 // pred_fallthru
          _
        // Predicated region
        $region21: #{tpu_custom_call.1} parent=11 // pred_check
          %p273 = pneg %p111
        $region22: #{tpu_custom_call.1} parent=11 // pred_check_branch
          %275 = sbr.rel (%p273) target = $region24
        $region23: #{tpu_custom_call.1} parent=11 // pred_region
          _
        $region24: #{tpu_custom_call.1} parent=11 // pred_fallthru
          _
        // Predicated region
        $region25: #{tpu_custom_call.1} parent=11 // pred_check
          %p276 = pneg %p132
        $region26: #{tpu_custom_call.1} parent=11 // pred_check_branch
          %278 = sbr.rel (%p276) target = $region28
        $region27: #{tpu_custom_call.1} parent=11 // pred_region
          _
        $region28: #{tpu_custom_call.1} parent=11 // pred_fallthru
          _
        // Predicated region
        $region29: #{tpu_custom_call.1} parent=11 // pred_check
          %p279 = pneg %p153
        $region30: #{tpu_custom_call.1} parent=11 // pred_check_branch
          %281 = sbr.rel (%p279) target = $region32
        $region31: #{tpu_custom_call.1} parent=11 // pred_region
          %s283 = ssub.s32 3072, 3072
          %284 = vsyncadd [#allocation8], %s283
          %s285 = sshll.u32 [#allocation9], 4
          %s286 = int_to_ptr.vmem [resolvable:$true] %s285
          %291 = dma.hbm_to_vmem [thread:$0]  %s5, 3072, %s286, [#allocation8], 64, 64, 4
        $region32: #{tpu_custom_call.1} parent=11 // pred_fallthru
          _
        // Predicated region
        $region33: #{tpu_custom_call.1} parent=11 // pred_check
          %p292 = pneg %p174
        $region34: #{tpu_custom_call.1} parent=11 // pred_check_branch
          %294 = sbr.rel (%p292) target = $region36
        $region35: #{tpu_custom_call.1} parent=11 // pred_region
          _
        $region36: #{tpu_custom_call.1} parent=11 // pred_fallthru
          _
        // Predicated region
        $region37: #{tpu_custom_call.1} parent=11 // pred_check
          %p295 = pneg %p195
        $region38: #{tpu_custom_call.1} parent=11 // pred_check_branch
          %297 = sbr.rel (%p295) target = $region40
        $region39: #{tpu_custom_call.1} parent=11 // pred_region
          _
        $region40: #{tpu_custom_call.1} parent=11 // pred_fallthru
          _
        // Predicated region
        $region41: #{tpu_custom_call.1} parent=11 // pred_check
          %p298 = pneg %p216
        $region42: #{tpu_custom_call.1} parent=11 // pred_check_branch
          %300 = sbr.rel (%p298) target = $region44
        $region43: #{tpu_custom_call.1} parent=11 // pred_region
          _
        $region44: #{tpu_custom_call.1} parent=11 // pred_fallthru
          _
      $region12: #{tpu_custom_call.1} parent=5 // pred_fallthru
        _
      %p301 = scmp.lt.s32.totalorder %s22, 2
      // Predicated region
      $region45: #{tpu_custom_call.1} parent=5 // pred_check
        %p302 = pneg %p301
      $region46: #{tpu_custom_call.1} parent=5 // pred_check_branch
        %304 = sbr.rel (%p302) target = $region48
      $region47: #{tpu_custom_call.1} parent=5 // pred_region
        // Predicated region
        $region49: #{tpu_custom_call.1} parent=47 // pred_check
          %p305 = pneg %p42
        $region50: #{tpu_custom_call.1} parent=47 // pred_check_branch
          %307 = sbr.rel (%p305) target = $region52
        $region51: #{tpu_custom_call.1} parent=47 // pred_region
          %s308 = sand.u32 %s32, 1
          %s309 = scalar_lea.sflag [#allocation5], %s308
          %s310 = sand.u32 %s32, 1
          %s311 = smul.addr %s310, 16
          %s312 = scalar_lea.vmem [#allocation4], %s311
          %s314 = ssub.s32 256, 256
          %315 = vsyncadd %s309, %s314
          %s316 = smul.addr %s22, 2
          %s317 = smul.addr %s316, 128
          %s318 = scalar_lea.hbm %s0, %s317
          %s319 = sshll.u32 %s312, 4
          %s320 = int_to_ptr.vmem [resolvable:$true] %s319
          %325 = dma.hbm_to_vmem [thread:$0]  %s318, 256, %s320, %s309, 128, 128, 8
        $region52: #{tpu_custom_call.1} parent=47 // pred_fallthru
          _
      $region48: #{tpu_custom_call.1} parent=5 // pred_fallthru
        _
      %p326 = scmp.le.s32.totalorder 1, %s22
      %p327 = scmp.lt.s32.totalorder %s22, 3
      %p328 = pnand %p326, %p327
      %p329 = pneg %p328
      // Predicated region
      $region53: #{tpu_custom_call.1} parent=5 // pred_check
        _
      $region54: #{tpu_custom_call.1} parent=5 // pred_check_branch
        %331 = sbr.rel (%p328) target = $region56
      $region55: #{tpu_custom_call.1} parent=5 // pred_region
        %s332 = ssub.s32 %s22, 1
        %s333 = sand.u32 %s35, 1
        %s334 = scalar_lea.sflag [#allocation5], %s333
        %s335 = sand.u32 %s35, 1
        %s336 = smul.addr %s335, 16
        %s337 = scalar_lea.vmem [#allocation4], %s336
        // Predicated region
        $region57: #{tpu_custom_call.1} parent=55 // pred_check
          %p338 = pneg %p48
        $region58: #{tpu_custom_call.1} parent=55 // pred_check_branch
          %340 = sbr.rel (%p338) target = $region60
        $region59: #{tpu_custom_call.1} parent=55 // pred_region
          %341 = dma.done %s334, 256
        $region60: #{tpu_custom_call.1} parent=55 // pred_fallthru
          _
        // Predicated region
        $region61: #{tpu_custom_call.1} parent=55 // pred_check
          %p342 = pneg %p69
        $region62: #{tpu_custom_call.1} parent=55 // pred_check_branch
          %344 = sbr.rel (%p342) target = $region64
        $region63: #{tpu_custom_call.1} parent=55 // pred_region
          %345 = dma.done [#allocation8], 3072
        $region64: #{tpu_custom_call.1} parent=55 // pred_fallthru
          _
        // Predicated region
        $region65: #{tpu_custom_call.1} parent=55 // pred_check
          %p346 = pneg %p153
        $region66: #{tpu_custom_call.1} parent=55 // pred_check_branch
          %348 = sbr.rel (%p346) target = $region68
        $region67: #{tpu_custom_call.1} parent=55 // pred_region
          %349 = dma.done [#allocation8], 3072
        $region68: #{tpu_custom_call.1} parent=55 // pred_fallthru
          _
        %s350 = sand.u32 %s35, 1
        %s351 = scalar_lea.sflag [#allocation5], %s350
        %s352 = sand.u32 %s35, 1
        %s353 = smul.addr %s352, 16
        %s354 = scalar_lea.vmem [#allocation4], %s353
        %p355 = pneg %p48
        %p356 = pneg %p45
        %p357 = pneg %p69
        %p358 = pneg %p66
        %p359 = pneg %p90
        %p360 = pneg %p87
        %p361 = pneg %p111
        %p362 = pneg %p108
        %p363 = pneg %p132
        %p364 = pneg %p129
        %p365 = pneg %p153
        %p366 = pneg %p150
        %p367 = pneg %p174
        %p368 = pneg %p171
        %p369 = pneg %p195
        %p370 = pneg %p192
        %p371 = pneg %p216
        %p372 = pneg %p213
        %p373 = pneg %p242
        %p374 = pneg %p239
        %s375 = sand.u32 %s229, 1
        %s376 = scalar_lea.sflag [#allocation6], %s375
        %s377 = sand.u32 %s229, 1
        %s378 = smul.addr %s377, 16
        %s379 = scalar_lea.vmem [#allocation10], %s378
        %381 = vst [vmem:[#allocation2] sm:$0xf] 0
        %382 = vst [vmem:[#allocation3] sm:$0xf] 0
        %v383 = vld [vmem:[%s337] sm:$0xff]
        %v384 = vld [vmem:[%s337 + $0x8] sm:$0xff]
        %v385 = vpack.c.bf16 %v384, %v383
        %v387 = vunpack.c.l.b16 %v385
        %v388 = vunpack.c.h.b16 %v385
        %v389 = vpack.c.b16 %v387, %v387
        %v390 = vpack.c.b16 %v388, %v388
        %393 = vst [vmem:[#allocation2 + $0x4] sm:$0xf] %v389
        %394 = vst [vmem:[#allocation2 + $0x8] sm:$0xf] %v390
        %v395 = vld [vmem:[#allocation2] sm:$0x8]
        %v396 = vld [vmem:[#allocation2 + $0x4] sm:$0xf]
        %v397 = vld [vmem:[#allocation2 + $0x8] sm:$0x7]
        %v398 = vld [vmem:[#allocation2 + $0x8] sm:$0xf]
        %v402 = vunpack.c.l.b16 %v395
        %v403 = vunpack.c.l.b16 %v396
        %v404 = vunpack.c.l.b16 %v397
        %v405 = vpack.c.b16 %v403, %v402
        %v406 = vpack.c.b16 %v404, %v404
        %v408 = vunpack.c.l.b16 %v398
        %v409 = vpack.c.b16 %v408, %v408
        %vm410 = vsmask.f32 7424
        %v412 = vshrl.u32 %v405, 16
        %v414 = vshll.u32 %v405, 16
        %v416 = vrot.slane %v414, 1
        %v417 = vor.u32 %v412, %v416
        %v419 = vshll.u32 %v409, 16
        %v421 = vrot.slane %v419, 1
        %v422 = vsel %vm410, %v417, %v421
        %v423 = vshrl.u32 %v409, 16
        %v425 = vor.u32 %v423, %v421
        %v426 = vpack.c.b16 %v408, %v403
        %v427 = vrot.slane %v426, 5
        %v428 = vld [vmem:[#allocation7] sm:$0xf]
        %v429 = vld [vmem:[#allocation7 + $0x4] sm:$0xf]
        %v430 = vld [vmem:[#allocation7 + $0x8] sm:$0xf]
        %v431 = vld [vmem:[#allocation7 + $0xc] sm:$0xf]
        %v432 = vld [vmem:[#allocation7 + $0x10] sm:$0xf]
        %v433 = vld [vmem:[#allocation7 + $0x14] sm:$0xf]
        %v434 = vld [vmem:[#allocation7 + $0x18] sm:$0xf]
        %v435 = vld [vmem:[#allocation7 + $0x1c] sm:$0xf]
        %v436 = vld [vmem:[#allocation7 + $0x20] sm:$0xf]
        %v437 = vld [vmem:[#allocation7 + $0x24] sm:$0xf]
        %v438 = vld [vmem:[#allocation7 + $0x28] sm:$0xf]
        %v439 = vld [vmem:[#allocation7 + $0x2c] sm:$0xf]
        %v440 = vld [vmem:[#allocation7 + $0x30] sm:$0xf]
        %v441 = vld [vmem:[#allocation7 + $0x34] sm:$0xf]
        %v442 = vld [vmem:[#allocation7 + $0x38] sm:$0xf]
        %v443 = vld [vmem:[#allocation7 + $0x3c] sm:$0xf]
        %v444 = vld [vmem:[#allocation7 + $0x40] sm:$0xf]
        %v445 = vld [vmem:[#allocation7 + $0x44] sm:$0xf]
        %v446 = vld [vmem:[#allocation7 + $0x48] sm:$0xf]
        %v447 = vld [vmem:[#allocation7 + $0x4c] sm:$0xf]
        %v448 = vld [vmem:[#allocation7 + $0x50] sm:$0xf]
        %v449 = vld [vmem:[#allocation7 + $0x54] sm:$0xf]
        %v450 = vld [vmem:[#allocation7 + $0x58] sm:$0xf]
        %v451 = vld [vmem:[#allocation7 + $0x5c] sm:$0xf]
        %v452 = vld [vmem:[#allocation7 + $0x60] sm:$0xf]
        %v453 = vld [vmem:[#allocation7 + $0x64] sm:$0xf]
        %v454 = vld [vmem:[#allocation7 + $0x68] sm:$0xf]
        %v455 = vld [vmem:[#allocation7 + $0x6c] sm:$0xf]
        %v456 = vld [vmem:[#allocation7 + $0x70] sm:$0xf]
        %v457 = vld [vmem:[#allocation7 + $0x74] sm:$0xf]
        %v458 = vld [vmem:[#allocation7 + $0x78] sm:$0xf]
        %v459 = vld [vmem:[#allocation7 + $0x7c] sm:$0xf]
        %v460 = vld [vmem:[#allocation7 + $0x80] sm:$0xf]
        %v461 = vld [vmem:[#allocation7 + $0x84] sm:$0xf]
        %v462 = vld [vmem:[#allocation7 + $0x88] sm:$0xf]
        %v463 = vld [vmem:[#allocation7 + $0x8c] sm:$0xf]
        %v464 = vld [vmem:[#allocation7 + $0x90] sm:$0xf]
        %v465 = vld [vmem:[#allocation7 + $0x94] sm:$0xf]
        %v466 = vld [vmem:[#allocation7 + $0x98] sm:$0xf]
        %v467 = vld [vmem:[#allocation7 + $0x9c] sm:$0xf]
        %v468 = vld [vmem:[#allocation7 + $0xa0] sm:$0xf]
        %v469 = vld [vmem:[#allocation7 + $0xa4] sm:$0xf]
        %v470 = vld [vmem:[#allocation7 + $0xa8] sm:$0xf]
        %v471 = vld [vmem:[#allocation7 + $0xac] sm:$0xf]
        %v472 = vld [vmem:[#allocation7 + $0xb0] sm:$0xf]
        %v473 = vld [vmem:[#allocation7 + $0xb4] sm:$0xf]
        %v474 = vld [vmem:[#allocation7 + $0xb8] sm:$0xf]
        %v475 = vld [vmem:[#allocation7 + $0xbc] sm:$0xf]
        %v476 = vld [vmem:[%s2] sm:$0x1]
        %v478 = vlaneseq
        %v479 = vshrl.u32 %v478, 7
        %v480 = vsub.s32 0, %v479
        %v481 = vrot.slane %v476, %v480
        %vm483 = vcmask 1044480
        %v484 = vrot.slane %v405, 3
        %v485 = vrot.slane %v406, 3
        %v486 = vsel %vm483, %v484, %v485
        %v487 = vrot.slane %v422, 3
        %v488 = vrot.slane %v425, 3
        %v489 = vsel %vm483, %v487, %v488
        %v490 = vrot.slane %v427, 3
        %v491 = vsel %vm483, %v490, %v490
        %v543 = vunpack.c.l.b16 %v428
        %v544 = vunpack.c.l.b16 %v429
        %v545 = vunpack.c.l.b16 %v430
        %v546 = vunpack.c.l.b16 %v431
        %v547 = vunpack.c.l.b16 %v432
        %v548 = vunpack.c.l.b16 %v433
        %v549 = vunpack.c.l.b16 %v434
        %v550 = vunpack.c.l.b16 %v435
        %v551 = vunpack.c.l.b16 %v436
        %v552 = vunpack.c.l.b16 %v437
        %v553 = vunpack.c.l.b16 %v438
        %v554 = vunpack.c.l.b16 %v439
        %v555 = vunpack.c.l.b16 %v440
        %v556 = vunpack.c.l.b16 %v441
        %v557 = vunpack.c.l.b16 %v442
        %v558 = vunpack.c.l.b16 %v443
        %v559 = vunpack.c.l.b16 %v444
        %v560 = vunpack.c.l.b16 %v445
        %v561 = vunpack.c.l.b16 %v446
        %v562 = vunpack.c.l.b16 %v447
        %v563 = vunpack.c.l.b16 %v448
        %v564 = vunpack.c.l.b16 %v449
        %v565 = vunpack.c.l.b16 %v450
        %v566 = vunpack.c.l.b16 %v451
        %v567 = vunpack.c.l.b16 %v452
        %v568 = vunpack.c.l.b16 %v453
        %v569 = vunpack.c.l.b16 %v454
        %v570 = vunpack.c.l.b16 %v455
        %v571 = vunpack.c.l.b16 %v456
        %v572 = vunpack.c.l.b16 %v457
        %v573 = vunpack.c.l.b16 %v458
        %v574 = vunpack.c.l.b16 %v459
        %v575 = vunpack.c.l.b16 %v460
        %v576 = vunpack.c.l.b16 %v461
        %v577 = vunpack.c.l.b16 %v462
        %v578 = vunpack.c.l.b16 %v463
        %v579 = vunpack.c.l.b16 %v464
        %v580 = vunpack.c.l.b16 %v465
        %v581 = vunpack.c.l.b16 %v466
        %v582 = vunpack.c.l.b16 %v467
        %v583 = vunpack.c.l.b16 %v468
        %v584 = vunpack.c.l.b16 %v469
        %v585 = vunpack.c.l.b16 %v470
        %v586 = vunpack.c.l.b16 %v471
        %v587 = vunpack.c.l.b16 %v472
        %v588 = vunpack.c.l.b16 %v473
        %v589 = vunpack.c.l.b16 %v474
        %v590 = vunpack.c.l.b16 %v475
        %v591 = vpack.c.b16 %v544, %v543
        %v592 = vpack.c.b16 %v546, %v545
        %v593 = vpack.c.b16 %v548, %v547
        %v594 = vpack.c.b16 %v550, %v549
        %v595 = vpack.c.b16 %v552, %v551
        %v596 = vpack.c.b16 %v554, %v553
        %v597 = vpack.c.b16 %v556, %v555
        %v598 = vpack.c.b16 %v558, %v557
        %v599 = vpack.c.b16 %v560, %v559
        %v600 = vpack.c.b16 %v562, %v561
        %v601 = vpack.c.b16 %v564, %v563
        %v602 = vpack.c.b16 %v566, %v565
        %v603 = vpack.c.b16 %v568, %v567
        %v604 = vpack.c.b16 %v570, %v569
        %v605 = vpack.c.b16 %v572, %v571
        %v606 = vpack.c.b16 %v574, %v573
        %v607 = vpack.c.b16 %v576, %v575
        %v608 = vpack.c.b16 %v578, %v577
        %v609 = vpack.c.b16 %v580, %v579
        %v610 = vpack.c.b16 %v582, %v581
        %v611 = vpack.c.b16 %v584, %v583
        %v612 = vpack.c.b16 %v586, %v585
        %v613 = vpack.c.b16 %v588, %v587
        %v614 = vpack.c.b16 %v590, %v589
        %639 = vmatprep.subr.bf16.mxu0 0
        %640 = vmatpush1.bf16.msra.mxu0 %v591
        %641 = vmatprep.subr.bf16.mxu0 0
        %642 = vmatpush1.bf16.msra.mxu0 %v592
        %643 = vmatprep.subr.bf16.mxu0 0
        %644 = vmatpush1.bf16.msra.mxu0 %v593
        %645 = vmatprep.subr.bf16.mxu0 0
        %646 = vmatpush1.bf16.msra.mxu0 %v594
        %647 = vmatprep.subr.bf16.mxu0 0
        %648 = vmatpush1.bf16.msra.mxu0 %v595
        %649 = vmatprep.subr.bf16.mxu0 0
        %650 = vmatpush1.bf16.msra.mxu0 %v596
        %651 = vmatprep.subr.bf16.mxu0 0
        %652 = vmatpush1.bf16.msra.mxu0 %v597
        %653 = vmatprep.subr.bf16.mxu0 0
        %654 = vmatpush1.bf16.msra.mxu0 %v598
        %655 = vmatprep.subr.bf16.mxu0 0
        %656 = vmatpush1.bf16.msra.mxu0 %v599
        %657 = vmatprep.subr.bf16.mxu0 0
        %658 = vmatpush1.bf16.msra.mxu0 %v600
        %659 = vmatprep.subr.bf16.mxu0 0
        %660 = vmatpush1.bf16.msra.mxu0 %v601
        %661 = vmatprep.subr.bf16.mxu0 0
        %662 = vmatpush1.bf16.msra.mxu0 %v602
        %663 = vmatprep.subr.bf16.mxu0 0
        %664 = vmatpush1.bf16.msra.mxu0 %v603
        %665 = vmatprep.subr.bf16.mxu0 0
        %666 = vmatpush1.bf16.msra.mxu0 %v604
        %667 = vmatprep.subr.bf16.mxu0 0
        %668 = vmatpush1.bf16.msra.mxu0 %v605
        %669 = vmatprep.subr.bf16.mxu0 0
        %670 = vmatpush1.bf16.msra.mxu0 %v606
        %671 = vmatprep.mubr.bf16.mxu0 %v489
        %672 = vmatmul.mubr.bf16.gmra.mrb[0].mxu0 %v486
        %v673 = vpop.f32.mrb[0].mxu0
        %v674 = vadd.f32 %v481, %v673
        %v675 = vpop.f32.mrb[0].mxu0
        %v676 = vpop.f32.mrb[0].mxu0
        %v677 = vadd.f32 %v481, %v676
        %v678 = vpop.f32.mrb[0].mxu0
        %679 = vdwg.mxu0
        %680 = vmatprep.subr.bf16.mxu0 0
        %681 = vmatpush1.bf16.msra.mxu0 %v607
        %682 = vmatprep.subr.bf16.mxu0 0
        %683 = vmatpush1.bf16.msra.mxu0 %v608
        %684 = vmatprep.subr.bf16.mxu0 0
        %685 = vmatpush1.bf16.msra.mxu0 %v609
        %686 = vmatprep.subr.bf16.mxu0 0
        %687 = vmatpush1.bf16.msra.mxu0 %v610
        %688 = vmatprep.subr.bf16.mxu0 0
        %689 = vmatpush1.bf16.msra.mxu0 %v611
        %690 = vmatprep.subr.bf16.mxu0 0
        %691 = vmatpush1.bf16.msra.mxu0 %v612
        %692 = vmatprep.subr.bf16.mxu0 0
        %693 = vmatpush1.bf16.msra.mxu0 %v613
        %694 = vmatprep.subr.bf16.mxu0 0
        %695 = vmatpush1.bf16.msra.mxu0 %v614
        %696 = vmatprep.subr.bf16.mxu0 0
        %697 = vmatpush1.bf16.msra.mxu0 0
        %698 = vmatprep.subr.bf16.mxu0 0
        %699 = vmatpush1.bf16.msra.mxu0 0
        %700 = vmatprep.subr.bf16.mxu0 0
        %701 = vmatpush1.bf16.msra.mxu0 0
        %702 = vmatprep.subr.bf16.mxu0 0
        %703 = vmatpush1.bf16.msra.mxu0 0
        %704 = vmatprep.subr.bf16.mxu0 0
        %705 = vmatpush1.bf16.msra.mxu0 0
        %706 = vmatprep.subr.bf16.mxu0 0
        %707 = vmatpush1.bf16.msra.mxu0 0
        %708 = vmatprep.subr.bf16.mxu0 0
        %709 = vmatpush1.bf16.msra.mxu0 0
        %710 = vmatprep.subr.bf16.mxu0 0
        %711 = vmatpush1.bf16.msra.mxu0 0
        %712 = vmatprep.mubr.bf16.mxu0 0
        %713 = vmatmul.mubr.bf16.gmra.mrb[0].mxu0 %v491
        %v714 = vpop.f32.mrb[0].mxu0
        %v715 = vadd.f32 %v674, %v714
        %v716 = vpop.f32.mrb[0].mxu0
        %v717 = vpop.f32.mrb[0].mxu0
        %v718 = vadd.f32 %v677, %v717
        %v719 = vpop.f32.mrb[0].mxu0
        %720 = vdwg.mxu0
        %v721 = vld [vmem:[%s3] sm:$0x1]
        %v722 = vld [vmem:[%s4] sm:$0x1]
        %723 = vadd.xlane.f32.xlu0 %v715
        %v724 = vpop.xlane.xlu0 %723
        %725 = vadd.xlane.f32.xlu0 %v718
        %v726 = vpop.xlane.xlu0 %725
        %v727 = vmul.f32 %v724, 0.03125
        %v728 = vmul.f32 %v726, 0.03125
        %v729 = vsub.f32 %v715, %v727
        %v730 = vsub.f32 %v718, %v728
        %v731 = vlaneseq
        %v732 = vand.u32 %v731, 127
        %vm733 = vcmp.lt.s32.totalorder %v732, 32
        %v734 = vsel %vm733, 1, 0
        %vm735 = vcmp.eq.s32.totalorder %v734, 1
        %v736 = vsel %vm735, %v729, 0.0
        %v737 = vsel %vm735, %v730, 0.0
        %v738 = vmul.f32 %v736, %v736
        %v739 = vmul.f32 %v737, %v737
        %740 = vadd.xlane.f32.xlu0 %v738
        %v741 = vpop.xlane.xlu0 %740
        %742 = vadd.xlane.f32.xlu0 %v739
        %v743 = vpop.xlane.xlu0 %742
        %v744 = vmul.f32 %v741, 0.032258064
        %v745 = vmul.f32 %v743, 0.032258064
        %v746 = vadd.f32 %v744, 1e-08
        %v747 = vadd.f32 %v745, 1e-08
        %v748 = vrsqrt.pop %v746
        %v749 = vrsqrt.pop %v747
        %v750 = vmul.f32 %v736, %v748
        %v751 = vmul.f32 %v737, %v749
        %v753 = vlaneseq
        %v754 = vshrl.u32 %v753, 7
        %v755 = vsub.s32 0, %v754
        %v756 = vrot.slane %v721, %v755
        %v758 = vmul.f32 %v756, %v750
        %v759 = vmul.f32 %v756, %v751
        %v761 = vlaneseq
        %v762 = vshrl.u32 %v761, 7
        %v763 = vsub.s32 0, %v762
        %v764 = vrot.slane %v722, %v763
        %v766 = vadd.f32 %v758, %v764
        %v767 = vadd.f32 %v759, %v764
        %v768 = vmax.f32 %v766, 0.0
        %v769 = vmax.f32 %v767, 0.0
        %v770 = vpack.c.bf16 %v769, %v768
        %v772 = vunpack.c.l.b16 %v770
        %v773 = vunpack.c.h.b16 %v770
        %v774 = vpack.c.b16 %v772, %v772
        %v775 = vpack.c.b16 %v773, %v773
        %778 = vst [vmem:[#allocation3 + $0x4] sm:$0xf] %v774
        %779 = vst [vmem:[#allocation3 + $0x8] sm:$0xf] %v775
        %v780 = vld [vmem:[#allocation3] sm:$0xc]
        %v781 = vld [vmem:[#allocation3 + $0x4] sm:$0xf]
        %v782 = vld [vmem:[#allocation3 + $0x8] sm:$0x3]
        %v783 = vld [vmem:[#allocation3] sm:$0x8]
        %v784 = vld [vmem:[#allocation3 + $0x8] sm:$0x7]
        %v785 = vld [vmem:[#allocation3 + $0x8] sm:$0xf]
        %v789 = vunpack.c.l.b16 %v780
        %v790 = vunpack.c.l.b16 %v781
        %v791 = vunpack.c.l.b16 %v782
        %v792 = vpack.c.b16 %v790, %v789
        %v793 = vpack.c.b16 %v791, %v791
        %v796 = vunpack.c.l.b16 %v783
        %v797 = vunpack.c.l.b16 %v784
        %v798 = vpack.c.b16 %v790, %v796
        %v799 = vpack.c.b16 %v797, %v797
        %vm800 = vcmask 1046528
        %v801 = vrot.slane %v798, 1
        %v802 = vrot.slane %v799, 1
        %v803 = vsel %vm800, %v801, %v802
        %v805 = vunpack.c.l.b16 %v785
        %v806 = vpack.c.b16 %v805, %v790
        %v807 = vrot.slane %v806, 6
        %v808 = vld [vmem:[#allocation9] sm:$0xf]
        %v809 = vld [vmem:[#allocation9 + $0x4] sm:$0xf]
        %v810 = vld [vmem:[#allocation9 + $0x8] sm:$0xf]
        %v811 = vld [vmem:[#allocation9 + $0xc] sm:$0xf]
        %v812 = vld [vmem:[#allocation9 + $0x10] sm:$0xf]
        %v813 = vld [vmem:[#allocation9 + $0x14] sm:$0xf]
        %v814 = vld [vmem:[#allocation9 + $0x18] sm:$0xf]
        %v815 = vld [vmem:[#allocation9 + $0x1c] sm:$0xf]
        %v816 = vld [vmem:[#allocation9 + $0x20] sm:$0xf]
        %v817 = vld [vmem:[#allocation9 + $0x24] sm:$0xf]
        %v818 = vld [vmem:[#allocation9 + $0x28] sm:$0xf]
        %v819 = vld [vmem:[#allocation9 + $0x2c] sm:$0xf]
        %v820 = vld [vmem:[#allocation9 + $0x30] sm:$0xf]
        %v821 = vld [vmem:[#allocation9 + $0x34] sm:$0xf]
        %v822 = vld [vmem:[#allocation9 + $0x38] sm:$0xf]
        %v823 = vld [vmem:[#allocation9 + $0x3c] sm:$0xf]
        %v824 = vld [vmem:[#allocation9 + $0x40] sm:$0xf]
        %v825 = vld [vmem:[#allocation9 + $0x44] sm:$0xf]
        %v826 = vld [vmem:[#allocation9 + $0x48] sm:$0xf]
        %v827 = vld [vmem:[#allocation9 + $0x4c] sm:$0xf]
        %v828 = vld [vmem:[#allocation9 + $0x50] sm:$0xf]
        %v829 = vld [vmem:[#allocation9 + $0x54] sm:$0xf]
        %v830 = vld [vmem:[#allocation9 + $0x58] sm:$0xf]
        %v831 = vld [vmem:[#allocation9 + $0x5c] sm:$0xf]
        %v832 = vld [vmem:[#allocation9 + $0x60] sm:$0xf]
        %v833 = vld [vmem:[#allocation9 + $0x64] sm:$0xf]
        %v834 = vld [vmem:[#allocation9 + $0x68] sm:$0xf]
        %v835 = vld [vmem:[#allocation9 + $0x6c] sm:$0xf]
        %v836 = vld [vmem:[#allocation9 + $0x70] sm:$0xf]
        %v837 = vld [vmem:[#allocation9 + $0x74] sm:$0xf]
        %v838 = vld [vmem:[#allocation9 + $0x78] sm:$0xf]
        %v839 = vld [vmem:[#allocation9 + $0x7c] sm:$0xf]
        %v840 = vld [vmem:[#allocation9 + $0x80] sm:$0xf]
        %v841 = vld [vmem:[#allocation9 + $0x84] sm:$0xf]
        %v842 = vld [vmem:[#allocation9 + $0x88] sm:$0xf]
        %v843 = vld [vmem:[#allocation9 + $0x8c] sm:$0xf]
        %v844 = vld [vmem:[#allocation9 + $0x90] sm:$0xf]
        %v845 = vld [vmem:[#allocation9 + $0x94] sm:$0xf]
        %v846 = vld [vmem:[#allocation9 + $0x98] sm:$0xf]
        %v847 = vld [vmem:[#allocation9 + $0x9c] sm:$0xf]
        %v848 = vld [vmem:[#allocation9 + $0xa0] sm:$0xf]
        %v849 = vld [vmem:[#allocation9 + $0xa4] sm:$0xf]
        %v850 = vld [vmem:[#allocation9 + $0xa8] sm:$0xf]
        %v851 = vld [vmem:[#allocation9 + $0xac] sm:$0xf]
        %v852 = vld [vmem:[#allocation9 + $0xb0] sm:$0xf]
        %v853 = vld [vmem:[#allocation9 + $0xb4] sm:$0xf]
        %v854 = vld [vmem:[#allocation9 + $0xb8] sm:$0xf]
        %v855 = vld [vmem:[#allocation9 + $0xbc] sm:$0xf]
        %v856 = vld [vmem:[%s6] sm:$0x1]
        %v858 = vlaneseq
        %v859 = vshrl.u32 %v858, 7
        %v860 = vsub.s32 0, %v859
        %v861 = vrot.slane %v856, %v860
        %vm863 = vcmask 1045504
        %v864 = vrot.slane %v792, 2
        %v865 = vrot.slane %v793, 2
        %v866 = vsel %vm863, %v864, %v865
        %v867 = vrot.slane %v803, 2
        %v868 = vrot.slane %v802, 2
        %v869 = vsel %vm863, %v867, %v868
        %v870 = vrot.slane %v807, 2
        %v871 = vsel %vm863, %v870, %v870
        %v923 = vunpack.c.l.b16 %v808
        %v924 = vunpack.c.l.b16 %v809
        %v925 = vunpack.c.l.b16 %v810
        %v926 = vunpack.c.l.b16 %v811
        %v927 = vunpack.c.l.b16 %v812
        %v928 = vunpack.c.l.b16 %v813
        %v929 = vunpack.c.l.b16 %v814
        %v930 = vunpack.c.l.b16 %v815
        %v931 = vunpack.c.l.b16 %v816
        %v932 = vunpack.c.l.b16 %v817
        %v933 = vunpack.c.l.b16 %v818
        %v934 = vunpack.c.l.b16 %v819
        %v935 = vunpack.c.l.b16 %v820
        %v936 = vunpack.c.l.b16 %v821
        %v937 = vunpack.c.l.b16 %v822
        %v938 = vunpack.c.l.b16 %v823
        %v939 = vunpack.c.l.b16 %v824
        %v940 = vunpack.c.l.b16 %v825
        %v941 = vunpack.c.l.b16 %v826
        %v942 = vunpack.c.l.b16 %v827
        %v943 = vunpack.c.l.b16 %v828
        %v944 = vunpack.c.l.b16 %v829
        %v945 = vunpack.c.l.b16 %v830
        %v946 = vunpack.c.l.b16 %v831
        %v947 = vunpack.c.l.b16 %v832
        %v948 = vunpack.c.l.b16 %v833
        %v949 = vunpack.c.l.b16 %v834
        %v950 = vunpack.c.l.b16 %v835
        %v951 = vunpack.c.l.b16 %v836
        %v952 = vunpack.c.l.b16 %v837
        %v953 = vunpack.c.l.b16 %v838
        %v954 = vunpack.c.l.b16 %v839
        %v955 = vunpack.c.l.b16 %v840
        %v956 = vunpack.c.l.b16 %v841
        %v957 = vunpack.c.l.b16 %v842
        %v958 = vunpack.c.l.b16 %v843
        %v959 = vunpack.c.l.b16 %v844
        %v960 = vunpack.c.l.b16 %v845
        %v961 = vunpack.c.l.b16 %v846
        %v962 = vunpack.c.l.b16 %v847
        %v963 = vunpack.c.l.b16 %v848
        %v964 = vunpack.c.l.b16 %v849
        %v965 = vunpack.c.l.b16 %v850
        %v966 = vunpack.c.l.b16 %v851
        %v967 = vunpack.c.l.b16 %v852
        %v968 = vunpack.c.l.b16 %v853
        %v969 = vunpack.c.l.b16 %v854
        %v970 = vunpack.c.l.b16 %v855
        %v971 = vpack.c.b16 %v924, %v923
        %v972 = vpack.c.b16 %v926, %v925
        %v973 = vpack.c.b16 %v928, %v927
        %v974 = vpack.c.b16 %v930, %v929
        %v975 = vpack.c.b16 %v932, %v931
        %v976 = vpack.c.b16 %v934, %v933
        %v977 = vpack.c.b16 %v936, %v935
        %v978 = vpack.c.b16 %v938, %v937
        %v979 = vpack.c.b16 %v940, %v939
        %v980 = vpack.c.b16 %v942, %v941
        %v981 = vpack.c.b16 %v944, %v943
        %v982 = vpack.c.b16 %v946, %v945
        %v983 = vpack.c.b16 %v948, %v947
        %v984 = vpack.c.b16 %v950, %v949
        %v985 = vpack.c.b16 %v952, %v951
        %v986 = vpack.c.b16 %v954, %v953
        %v987 = vpack.c.b16 %v956, %v955
        %v988 = vpack.c.b16 %v958, %v957
        %v989 = vpack.c.b16 %v960, %v959
        %v990 = vpack.c.b16 %v962, %v961
        %v991 = vpack.c.b16 %v964, %v963
        %v992 = vpack.c.b16 %v966, %v965
        %v993 = vpack.c.b16 %v968, %v967
        %v994 = vpack.c.b16 %v970, %v969
        %1019 = vmatprep.subr.bf16.mxu0 0
        %1020 = vmatpush1.bf16.msra.mxu0 %v971
        %1021 = vmatprep.subr.bf16.mxu0 0
        %1022 = vmatpush1.bf16.msra.mxu0 %v972
        %1023 = vmatprep.subr.bf16.mxu0 0
        %1024 = vmatpush1.bf16.msra.mxu0 %v973
        %1025 = vmatprep.subr.bf16.mxu0 0
        %1026 = vmatpush1.bf16.msra.mxu0 %v974
        %1027 = vmatprep.subr.bf16.mxu0 0
        %1028 = vmatpush1.bf16.msra.mxu0 %v975
        %1029 = vmatprep.subr.bf16.mxu0 0
        %1030 = vmatpush1.bf16.msra.mxu0 %v976
        %1031 = vmatprep.subr.bf16.mxu0 0
        %1032 = vmatpush1.bf16.msra.mxu0 %v977
        %1033 = vmatprep.subr.bf16.mxu0 0
        %1034 = vmatpush1.bf16.msra.mxu0 %v978
        %1035 = vmatprep.subr.bf16.mxu0 0
        %1036 = vmatpush1.bf16.msra.mxu0 %v979
        %1037 = vmatprep.subr.bf16.mxu0 0
        %1038 = vmatpush1.bf16.msra.mxu0 %v980
        %1039 = vmatprep.subr.bf16.mxu0 0
        %1040 = vmatpush1.bf16.msra.mxu0 %v981
        %1041 = vmatprep.subr.bf16.mxu0 0
        %1042 = vmatpush1.bf16.msra.mxu0 %v982
        %1043 = vmatprep.subr.bf16.mxu0 0
        %1044 = vmatpush1.bf16.msra.mxu0 %v983
        %1045 = vmatprep.subr.bf16.mxu0 0
        %1046 = vmatpush1.bf16.msra.mxu0 %v984
        %1047 = vmatprep.subr.bf16.mxu0 0
        %1048 = vmatpush1.bf16.msra.mxu0 %v985
        %1049 = vmatprep.subr.bf16.mxu0 0
        %1050 = vmatpush1.bf16.msra.mxu0 %v986
        %1051 = vmatprep.mubr.bf16.mxu0 %v869
        %1052 = vmatmul.mubr.bf16.gmra.mrb[0].mxu0 %v866
        %v1053 = vpop.f32.mrb[0].mxu0
        %v1054 = vadd.f32 %v861, %v1053
        %v1055 = vpop.f32.mrb[0].mxu0
        %v1056 = vpop.f32.mrb[0].mxu0
        %v1057 = vadd.f32 %v861, %v1056
        %v1058 = vpop.f32.mrb[0].mxu0
        %1059 = vdwg.mxu0
        %1060 = vmatprep.subr.bf16.mxu0 0
        %1061 = vmatpush1.bf16.msra.mxu0 %v987
        %1062 = vmatprep.subr.bf16.mxu0 0
        %1063 = vmatpush1.bf16.msra.mxu0 %v988
        %1064 = vmatprep.subr.bf16.mxu0 0
        %1065 = vmatpush1.bf16.msra.mxu0 %v989
        %1066 = vmatprep.subr.bf16.mxu0 0
        %1067 = vmatpush1.bf16.msra.mxu0 %v990
        %1068 = vmatprep.subr.bf16.mxu0 0
        %1069 = vmatpush1.bf16.msra.mxu0 %v991
        %1070 = vmatprep.subr.bf16.mxu0 0
        %1071 = vmatpush1.bf16.msra.mxu0 %v992
        %1072 = vmatprep.subr.bf16.mxu0 0
        %1073 = vmatpush1.bf16.msra.mxu0 %v993
        %1074 = vmatprep.subr.bf16.mxu0 0
        %1075 = vmatpush1.bf16.msra.mxu0 %v994
        %1076 = vmatprep.subr.bf16.mxu0 0
        %1077 = vmatpush1.bf16.msra.mxu0 0
        %1078 = vmatprep.subr.bf16.mxu0 0
        %1079 = vmatpush1.bf16.msra.mxu0 0
        %1080 = vmatprep.subr.bf16.mxu0 0
        %1081 = vmatpush1.bf16.msra.mxu0 0
        %1082 = vmatprep.subr.bf16.mxu0 0
        %1083 = vmatpush1.bf16.msra.mxu0 0
        %1084 = vmatprep.subr.bf16.mxu0 0
        %1085 = vmatpush1.bf16.msra.mxu0 0
        %1086 = vmatprep.subr.bf16.mxu0 0
        %1087 = vmatpush1.bf16.msra.mxu0 0
        %1088 = vmatprep.subr.bf16.mxu0 0
        %1089 = vmatpush1.bf16.msra.mxu0 0
        %1090 = vmatprep.subr.bf16.mxu0 0
        %1091 = vmatpush1.bf16.msra.mxu0 0
        %1092 = vmatprep.mubr.bf16.mxu0 0
        %1093 = vmatmul.mubr.bf16.gmra.mrb[0].mxu0 %v871
        %v1094 = vpop.f32.mrb[0].mxu0
        %v1095 = vadd.f32 %v1054, %v1094
        %v1096 = vpop.f32.mrb[0].mxu0
        %v1097 = vpop.f32.mrb[0].mxu0
        %v1098 = vadd.f32 %v1057, %v1097
        %v1099 = vpop.f32.mrb[0].mxu0
        %1100 = vdwg.mxu0
        %v1101 = vld [vmem:[%s7] sm:$0x1]
        %v1102 = vld [vmem:[%s8] sm:$0x1]
        %1103 = vadd.xlane.f32.xlu0 %v1095
        %v1104 = vpop.xlane.xlu0 %1103
        %1105 = vadd.xlane.f32.xlu0 %v1098
        %v1106 = vpop.xlane.xlu0 %1105
        %v1107 = vmul.f32 %v1104, 0.03125
        %v1108 = vmul.f32 %v1106, 0.03125
        %v1109 = vsub.f32 %v1095, %v1107
        %v1110 = vsub.f32 %v1098, %v1108
        %v1111 = vsel %vm735, %v1109, 0.0
        %v1112 = vsel %vm735, %v1110, 0.0
        %v1113 = vmul.f32 %v1111, %v1111
        %v1114 = vmul.f32 %v1112, %v1112
        %1115 = vadd.xlane.f32.xlu0 %v1113
        %v1116 = vpop.xlane.xlu0 %1115
        %1117 = vadd.xlane.f32.xlu0 %v1114
        %v1118 = vpop.xlane.xlu0 %1117
        %v1119 = vmul.f32 %v1116, 0.032258064
        %v1120 = vmul.f32 %v1118, 0.032258064
        %v1121 = vadd.f32 %v1119, 1e-08
        %v1122 = vadd.f32 %v1120, 1e-08
        %v1123 = vrsqrt.pop %v1121
        %v1124 = vrsqrt.pop %v1122
        %v1125 = vmul.f32 %v1111, %v1123
        %v1126 = vmul.f32 %v1112, %v1124
        %v1128 = vlaneseq
        %v1129 = vshrl.u32 %v1128, 7
        %v1130 = vsub.s32 0, %v1129
        %v1131 = vrot.slane %v1101, %v1130
        %v1133 = vmul.f32 %v1131, %v1125
        %v1134 = vmul.f32 %v1131, %v1126
        %v1136 = vlaneseq
        %v1137 = vshrl.u32 %v1136, 7
        %v1138 = vsub.s32 0, %v1137
        %v1139 = vrot.slane %v1102, %v1138
        %v1141 = vadd.f32 %v1133, %v1139
        %v1142 = vadd.f32 %v1134, %v1139
        %v1143 = vmax.f32 %v1141, 0.0
        %v1144 = vmax.f32 %v1142, 0.0
        %v1145 = vld [vmem:[%s337] sm:$0xff]
        %v1146 = vld [vmem:[%s337 + $0x8] sm:$0xff]
        %v1147 = vadd.f32 %v1145, %v1143
        %v1148 = vadd.f32 %v1146, %v1144
        %1149 = vst [vmem:[%s379] sm:$0xff] %v1147
        %1150 = vst [vmem:[%s379 + $0x8] sm:$0xff] %v1148
        %s1151 = sand.u32 %s229, 1
        %s1152 = scalar_lea.sflag [#allocation6], %s1151
        %s1153 = sand.u32 %s229, 1
        %s1154 = smul.addr %s1153, 16
        %s1155 = scalar_lea.vmem [#allocation10], %s1154
        // Predicated region
        $region69: #{tpu_custom_call.1} parent=55 // pred_check
          %p1156 = pneg %p239
        $region70: #{tpu_custom_call.1} parent=55 // pred_check_branch
          %1158 = sbr.rel (%p1156) target = $region72
        $region71: #{tpu_custom_call.1} parent=55 // pred_region
          %s1160 = ssub.s32 256, 256
          %1161 = vsyncadd %s1152, %s1160
          %s1162 = smul.addr %s27, 2
          %s1163 = smul.addr %s1162, 128
          %s1164 = scalar_lea.hbm %s9, %s1163
          %s1165 = sshll.u32 %s1155, 4
          %s1166 = int_to_ptr.vmem [resolvable:$true] %s1165
          %1171 = dma.vmem_to_hbm [thread:$0]  %s1166, 256, %s1164, %s1152, 128, 128, 8
        $region72: #{tpu_custom_call.1} parent=55 // pred_fallthru
          _
      $region56: #{tpu_custom_call.1} parent=5 // pred_fallthru
        _
      %p1172 = scmp.le.s32.totalorder 2, %s22
      // Predicated region
      $region73: #{tpu_custom_call.1} parent=5 // pred_check
        %p1173 = pneg %p1172
      $region74: #{tpu_custom_call.1} parent=5 // pred_check_branch
        %1175 = sbr.rel (%p1173) target = $region76
      $region75: #{tpu_custom_call.1} parent=5 // pred_region
        %s1176 = ssub.s32 %s22, 2
        // Predicated region
        $region77: #{tpu_custom_call.1} parent=75 // pred_check
          %p1177 = pneg %p245
        $region78: #{tpu_custom_call.1} parent=75 // pred_check_branch
          %1179 = sbr.rel (%p1177) target = $region80
        $region79: #{tpu_custom_call.1} parent=75 // pred_region
          %s1180 = sand.u32 %s230, 1
          %s1181 = scalar_lea.sflag [#allocation6], %s1180
          %s1182 = sand.u32 %s230, 1
          %s1183 = smul.addr %s1182, 16
          %s1184 = scalar_lea.vmem [#allocation10], %s1183
          %1185 = dma.done %s1181, 256
        $region80: #{tpu_custom_call.1} parent=75 // pred_fallthru
          _
      $region76: #{tpu_custom_call.1} parent=5 // pred_fallthru
        _
    $region6: #{tpu_custom_call.1} parent=1 // loop_footer
      %s26 = sadd.s32 1, %s22
    $region7: #{tpu_custom_call.1} parent=1 // loop_footer_branch
      %21 = sbr.rel target = $region3
    $region8: #{tpu_custom_call.1} parent=1 // loop_exit
      _
    %1186 = vsyncpa [#allocation5], 1
    %s1187 = scalar_lea.sflag [#allocation5], 1
    %1188 = vsyncpa %s1187, 1
    %1189 = vsyncpa [#allocation8], 1
    %1190 = vsyncpa [#allocation6], 1
    %s1191 = scalar_lea.sflag [#allocation6], 1
    %1192 = vsyncpa %s1191, 1

// kernel: tpu_custom_call.1
$region0: #{tpu_custom_call.1}
  #allocation0 [shape = 'u32[]', space=smem, size = 0x4, offset = 0x4, fixed_abs, tag = 'smem constant byte address 0x4 - core index']
  #allocation1 [shape = 'u32[144,128]{1,0:T(1,128)}', space=vmem, size = 0x12000, scoped, tag = 'internal scratch']
  #allocation2 [shape = 'bf16[1,24,128]{2,1,0:T(8,128)(2,1)}', space=vmem, size = 0x1800, scoped, tag = 'scratch operand']
  #allocation3 [shape = 'bf16[1,24,128]{2,1,0:T(8,128)(2,1)}', space=vmem, size = 0x1800, scoped, tag = 'scratch operand']
  %s0 = inlined_call_operand.hbm [shape: f32[2,16,128], index: 0, kind: input, shape index: {}]
  %s1 = inlined_call_operand.hbm [shape: bf16[384,128], index: 1, kind: input, shape index: {}]
  %s2 = inlined_call_operand.vmem [shape: f32[1,128], index: 2, kind: input, shape index: {}]
  %s3 = inlined_call_operand.vmem [shape: f32[1,128], index: 3, kind: input, shape index: {}]
  %s4 = inlined_call_operand.vmem [shape: f32[1,128], index: 4, kind: input, shape index: {}]
  %s5 = inlined_call_operand.hbm [shape: bf16[384,128], index: 5, kind: input, shape index: {}]
  %s6 = inlined_call_operand.vmem [shape: f32[1,128], index: 6, kind: input, shape index: {}]
  %s7 = inlined_call_operand.vmem [shape: f32[1,128], index: 7, kind: input, shape index: {}]
  %s8 = inlined_call_operand.vmem [shape: f32[1,128], index: 8, kind: input, shape index: {}]
  %s9 = inlined_call_operand.hbm [shape: f32[2,16,128], index: 9, kind: output, shape index: {}]
  %s10 = sld [smem:[#allocation0]]
  $region81: #{tpu_custom_call.1} parent=0
    _
  %s12 = ssub.s32 1, %s10
  %s13 = scalar_select 0, %s12, %s10
  $region1: #{tpu_custom_call.1} parent=0
    #allocation4 [shape = 'u8[16384]{0}', space=vmem, size = 0x4000, scoped, tag = 'input window, operand 0']
    #allocation5 [shape = 's32[2]{0}', space=sflag, size = 0x8, scoped, tag = 'scoped memory for tpu_custom_call.1']
    #allocation6 [shape = 's32[2]{0}', space=sflag, size = 0x8, scoped, tag = 'scoped memory for tpu_custom_call.1']
    #allocation7 [shape = 'u8[98304]{0}', space=vmem, size = 0x18000, scoped, tag = 'input window, operand 1, single buffered']
    #allocation8 [shape = 's32[1]{0}', space=sflag, size = 0x4, scoped, tag = 'scoped memory for tpu_custom_call.1']
    #allocation9 [shape = 'u8[98304]{0}', space=vmem, size = 0x18000, scoped, tag = 'input window, operand 5, single buffered']
    #allocation10 [shape = 'u8[16384]{0}', space=vmem, size = 0x4000, scoped, tag = 'output window, operand 0']
    %14 = vsyncpa [#allocation5], 0
    %s15 = scalar_lea.sflag [#allocation5], 1
    %16 = vsyncpa %s15, 0
    %17 = vsyncpa [#allocation8], 0
    %18 = vsyncpa [#allocation6], 0
    %s19 = scalar_lea.sflag [#allocation6], 1
    %20 = vsyncpa %s19, 0
    loop: start=0, step=1, limit=4
    $region2: #{tpu_custom_call.1} parent=1 // loop_pre_header
      _
    $region3: #{tpu_custom_call.1} parent=1 // loop_header
      %s22 = sphi 0, %s26
      %p23 = scmp.ge.s32.totalorder %s22, 4
      %s32 = sphi 0, %s34
      %s35 = sphi 0, %s32
      %s36 = sphi 0, %s35
      %s52 = sphi 0, %s36
      %s56 = sphi 0, %s56
      %s58 = sphi 0, %s56
      %s59 = sphi 0, %s58
      %s73 = sphi 0, %s59
      %s77 = sphi 0, %s77
      %s79 = sphi 0, %s77
      %s80 = sphi 0, %s79
      %s94 = sphi 0, %s80
      %s98 = sphi 0, %s98
      %s100 = sphi 0, %s98
      %s101 = sphi 0, %s100
      %s115 = sphi 0, %s101
      %s119 = sphi 0, %s119
      %s121 = sphi 0, %s119
      %s122 = sphi 0, %s121
      %s136 = sphi 0, %s122
      %s140 = sphi 0, %s140
      %s142 = sphi 0, %s140
      %s143 = sphi 0, %s142
      %s157 = sphi 0, %s143
      %s161 = sphi 0, %s161
      %s163 = sphi 0, %s161
      %s164 = sphi 0, %s163
      %s178 = sphi 0, %s164
      %s182 = sphi 0, %s182
      %s184 = sphi 0, %s182
      %s185 = sphi 0, %s184
      %s199 = sphi 0, %s185
      %s203 = sphi 0, %s203
      %s205 = sphi 0, %s203
      %s206 = sphi 0, %s205
      %s220 = sphi 0, %s206
      %s226 = sphi 0, %s228
      %s229 = sphi 0, %s226
      %s230 = sphi 0, %s229
      %s246 = sphi 0, %s230
    $region4: #{tpu_custom_call.1} parent=1 // loop_header_branch
      %25 = sbr.rel (%p23) target = $region8
    $region5: #{tpu_custom_call.1} parent=1 // loop_body
      %s27 = ssub.s32 %s22, 1
      %s28 = ssub.s32 %s22, 2
      %s29 = sadd.s32 %s22, 1
      %s30 = ssub.s32 %s22, %s29
      %p31 = scmp.eq.s32.totalorder %s30, 0
      %s33 = sadd.s32 %s32, 1
      %s34 = scalar_select %p31, %s32, %s33
      %p37 = pneg %p31
      %p38 = scmp.eq.s32.totalorder %s22, 1
      %p39 = por %p37, %p38
      %p40 = scmp.ne.s32.totalorder %s32, %s35
      %p41 = scmp.eq.s32.totalorder %s22, 0
      %p42 = por %p40, %p41
      %p43 = scmp.ne.s32.totalorder %s32, %s35
      %p44 = scmp.eq.s32.totalorder %s27, 1
      %p45 = por %p43, %p44
      %p46 = scmp.ne.s32.totalorder %s35, %s36
      %p47 = scmp.eq.s32.totalorder %s27, 0
      %p48 = por %p46, %p47
      %p49 = scmp.ne.s32.totalorder %s35, %s36
      %p50 = scmp.eq.s32.totalorder %s28, 1
      %p51 = por %p49, %p50
      %p53 = scmp.ne.s32.totalorder %s36, %s52
      %p54 = scmp.eq.s32.totalorder %s28, 0
      %p55 = por %p53, %p54
      %s57 = sadd.s32 %s56, 1
      %p60 = scmp.eq.s32.totalorder %s22, 1
      %p61 = scmp.ne.s32.totalorder %s56, %s58
      %p62 = scmp.eq.s32.totalorder %s22, 0
      %p63 = por %p61, %p62
      %p64 = scmp.ne.s32.totalorder %s56, %s58
      %p65 = scmp.eq.s32.totalorder %s27, 1
      %p66 = por %p64, %p65
      %p67 = scmp.ne.s32.totalorder %s58, %s59
      %p68 = scmp.eq.s32.totalorder %s27, 0
      %p69 = por %p67, %p68
      %p70 = scmp.ne.s32.totalorder %s58, %s59
      %p71 = scmp.eq.s32.totalorder %s28, 1
      %p72 = por %p70, %p71
      %p74 = scmp.ne.s32.totalorder %s59, %s73
      %p75 = scmp.eq.s32.totalorder %s28, 0
      %p76 = por %p74, %p75
      %s78 = sadd.s32 %s77, 1
      %p81 = scmp.eq.s32.totalorder %s22, 1
      %p82 = scmp.ne.s32.totalorder %s77, %s79
      %p83 = scmp.eq.s32.totalorder %s22, 0
      %p84 = por %p82, %p83
      %p85 = scmp.ne.s32.totalorder %s77, %s79
      %p86 = scmp.eq.s32.totalorder %s27, 1
      %p87 = por %p85, %p86
      %p88 = scmp.ne.s32.totalorder %s79, %s80
      %p89 = scmp.eq.s32.totalorder %s27, 0
      %p90 = por %p88, %p89
      %p91 = scmp.ne.s32.totalorder %s79, %s80
      %p92 = scmp.eq.s32.totalorder %s28, 1
      %p93 = por %p91, %p92
      %p95 = scmp.ne.s32.totalorder %s80, %s94
      %p96 = scmp.eq.s32.totalorder %s28, 0
      %p97 = por %p95, %p96
      %s99 = sadd.s32 %s98, 1
      %p102 = scmp.eq.s32.totalorder %s22, 1
      %p103 = scmp.ne.s32.totalorder %s98, %s100
      %p104 = scmp.eq.s32.totalorder %s22, 0
      %p105 = por %p103, %p104
      %p106 = scmp.ne.s32.totalorder %s98, %s100
      %p107 = scmp.eq.s32.totalorder %s27, 1
      %p108 = por %p106, %p107
      %p109 = scmp.ne.s32.totalorder %s100, %s101
      %p110 = scmp.eq.s32.totalorder %s27, 0
      %p111 = por %p109, %p110
      %p112 = scmp.ne.s32.totalorder %s100, %s101
      %p113 = scmp.eq.s32.totalorder %s28, 1
      %p114 = por %p112, %p113
      %p116 = scmp.ne.s32.totalorder %s101, %s115
      %p117 = scmp.eq.s32.totalorder %s28, 0
      %p118 = por %p116, %p117
      %s120 = sadd.s32 %s119, 1
      %p123 = scmp.eq.s32.totalorder %s22, 1
      %p124 = scmp.ne.s32.totalorder %s119, %s121
      %p125 = scmp.eq.s32.totalorder %s22, 0
      %p126 = por %p124, %p125
      %p127 = scmp.ne.s32.totalorder %s119, %s121
      %p128 = scmp.eq.s32.totalorder %s27, 1
      %p129 = por %p127, %p128
      %p130 = scmp.ne.s32.totalorder %s121, %s122
      %p131 = scmp.eq.s32.totalorder %s27, 0
      %p132 = por %p130, %p131
      %p133 = scmp.ne.s32.totalorder %s121, %s122
      %p134 = scmp.eq.s32.totalorder %s28, 1
      %p135 = por %p133, %p134
      %p137 = scmp.ne.s32.totalorder %s122, %s136
      %p138 = scmp.eq.s32.totalorder %s28, 0
      %p139 = por %p137, %p138
      %s141 = sadd.s32 %s140, 1
      %p144 = scmp.eq.s32.totalorder %s22, 1
      %p145 = scmp.ne.s32.totalorder %s140, %s142
      %p146 = scmp.eq.s32.totalorder %s22, 0
      %p147 = por %p145, %p146
      %p148 = scmp.ne.s32.totalorder %s140, %s142
      %p149 = scmp.eq.s32.totalorder %s27, 1
      %p150 = por %p148, %p149
      %p151 = scmp.ne.s32.totalorder %s142, %s143
      %p152 = scmp.eq.s32.totalorder %s27, 0
      %p153 = por %p151, %p152
      %p154 = scmp.ne.s32.totalorder %s142, %s143
      %p155 = scmp.eq.s32.totalorder %s28, 1
      %p156 = por %p154, %p155
      %p158 = scmp.ne.s32.totalorder %s143, %s157
      %p159 = scmp.eq.s32.totalorder %s28, 0
      %p160 = por %p158, %p159
      %s162 = sadd.s32 %s161, 1
      %p165 = scmp.eq.s32.totalorder %s22, 1
      %p166 = scmp.ne.s32.totalorder %s161, %s163
      %p167 = scmp.eq.s32.totalorder %s22, 0
      %p168 = por %p166, %p167
      %p169 = scmp.ne.s32.totalorder %s161, %s163
      %p170 = scmp.eq.s32.totalorder %s27, 1
      %p171 = por %p169, %p170
      %p172 = scmp.ne.s32.totalorder %s163, %s164
      %p173 = scmp.eq.s32.totalorder %s27, 0
      %p174 = por %p172, %p173
      %p175 = scmp.ne.s32.totalorder %s163, %s164
      %p176 = scmp.eq.s32.totalorder %s28, 1
      %p177 = por %p175, %p176
      %p179 = scmp.ne.s32.totalorder %s164, %s178
      %p180 = scmp.eq.s32.totalorder %s28, 0
      %p181 = por %p179, %p180
      %s183 = sadd.s32 %s182, 1
      %p186 = scmp.eq.s32.totalorder %s22, 1
      %p187 = scmp.ne.s32.totalorder %s182, %s184
      %p188 = scmp.eq.s32.totalorder %s22, 0
      %p189 = por %p187, %p188
      %p190 = scmp.ne.s32.totalorder %s182, %s184
      %p191 = scmp.eq.s32.totalorder %s27, 1
      %p192 = por %p190, %p191
      %p193 = scmp.ne.s32.totalorder %s184, %s185
      %p194 = scmp.eq.s32.totalorder %s27, 0
      %p195 = por %p193, %p194
      %p196 = scmp.ne.s32.totalorder %s184, %s185
      %p197 = scmp.eq.s32.totalorder %s28, 1
      %p198 = por %p196, %p197
      %p200 = scmp.ne.s32.totalorder %s185, %s199
      %p201 = scmp.eq.s32.totalorder %s28, 0
      %p202 = por %p200, %p201
      %s204 = sadd.s32 %s203, 1
      %p207 = scmp.eq.s32.totalorder %s22, 1
      %p208 = scmp.ne.s32.totalorder %s203, %s205
      %p209 = scmp.eq.s32.totalorder %s22, 0
      %p210 = por %p208, %p209
      %p211 = scmp.ne.s32.totalorder %s203, %s205
      %p212 = scmp.eq.s32.totalorder %s27, 1
      %p213 = por %p211, %p212
      %p214 = scmp.ne.s32.totalorder %s205, %s206
      %p215 = scmp.eq.s32.totalorder %s27, 0
      %p216 = por %p214, %p215
      %p217 = scmp.ne.s32.totalorder %s205, %s206
      %p218 = scmp.eq.s32.totalorder %s28, 1
      %p219 = por %p217, %p218
      %p221 = scmp.ne.s32.totalorder %s206, %s220
      %p222 = scmp.eq.s32.totalorder %s28, 0
      %p223 = por %p221, %p222
      %s224 = ssub.s32 %s22, %s29
      %p225 = scmp.eq.s32.totalorder %s224, 0
      %s227 = sadd.s32 %s226, 1
      %s228 = scalar_select %p225, %s226, %s227
      %p231 = pneg %p225
      %p232 = scmp.eq.s32.totalorder %s22, 1
      %p233 = por %p231, %p232
      %p234 = scmp.ne.s32.totalorder %s226, %s229
      %p235 = scmp.eq.s32.totalorder %s22, 0
      %p236 = por %p234, %p235
      %p237 = scmp.ne.s32.totalorder %s226, %s229
      %p238 = scmp.eq.s32.totalorder %s27, 1
      %p239 = por %p237, %p238
      %p240 = scmp.ne.s32.totalorder %s229, %s230
      %p241 = scmp.eq.s32.totalorder %s27, 0
      %p242 = por %p240, %p241
      %p243 = scmp.ne.s32.totalorder %s229, %s230
      %p244 = scmp.eq.s32.totalorder %s28, 1
      %p245 = por %p243, %p244
      %p247 = scmp.ne.s32.totalorder %s230, %s246
      %p248 = scmp.eq.s32.totalorder %s28, 0
      %p249 = por %p247, %p248
      %p250 = scmp.le.s32.totalorder 1, %s22
      %p251 = scmp.lt.s32.totalorder %s22, 3
      %p252 = pnand %p250, %p251
      %p253 = pneg %p252
      // Predicated region
      $region9: #{tpu_custom_call.1} parent=5 // pred_check
        _
      $region10: #{tpu_custom_call.1} parent=5 // pred_check_branch
        %255 = sbr.rel (%p252) target = $region12
      $region11: #{tpu_custom_call.1} parent=5 // pred_region
        %s256 = ssub.s32 %s22, 1
        // Predicated region
        $region13: #{tpu_custom_call.1} parent=11 // pred_check
          %p257 = pneg %p69
        $region14: #{tpu_custom_call.1} parent=11 // pred_check_branch
          %259 = sbr.rel (%p257) target = $region16
        $region15: #{tpu_custom_call.1} parent=11 // pred_region
          %s261 = ssub.s32 3072, 3072
          %262 = vsyncadd [#allocation8], %s261
          %s263 = sshll.u32 [#allocation7], 4
          %s264 = int_to_ptr.vmem [resolvable:$true] %s263
          %269 = dma.hbm_to_vmem [thread:$0]  %s1, 3072, %s264, [#allocation8], 64, 64, 4
        $region16: #{tpu_custom_call.1} parent=11 // pred_fallthru
          _
        // Predicated region
        $region17: #{tpu_custom_call.1} parent=11 // pred_check
          %p270 = pneg %p90
        $region18: #{tpu_custom_call.1} parent=11 // pred_check_branch
          %272 = sbr.rel (%p270) target = $region20
        $region19: #{tpu_custom_call.1} parent=11 // pred_region
          _
        $region20: #{tpu_custom_call.1} parent=11 // pred_fallthru
          _
        // Predicated region
        $region21: #{tpu_custom_call.1} parent=11 // pred_check
          %p273 = pneg %p111
        $region22: #{tpu_custom_call.1} parent=11 // pred_check_branch
          %275 = sbr.rel (%p273) target = $region24
        $region23: #{tpu_custom_call.1} parent=11 // pred_region
          _
        $region24: #{tpu_custom_call.1} parent=11 // pred_fallthru
          _
        // Predicated region
        $region25: #{tpu_custom_call.1} parent=11 // pred_check
          %p276 = pneg %p132
        $region26: #{tpu_custom_call.1} parent=11 // pred_check_branch
          %278 = sbr.rel (%p276) target = $region28
        $region27: #{tpu_custom_call.1} parent=11 // pred_region
          _
        $region28: #{tpu_custom_call.1} parent=11 // pred_fallthru
          _
        // Predicated region
        $region29: #{tpu_custom_call.1} parent=11 // pred_check
          %p279 = pneg %p153
        $region30: #{tpu_custom_call.1} parent=11 // pred_check_branch
          %281 = sbr.rel (%p279) target = $region32
        $region31: #{tpu_custom_call.1} parent=11 // pred_region
          %s283 = ssub.s32 3072, 3072
          %284 = vsyncadd [#allocation8], %s283
          %s285 = sshll.u32 [#allocation9], 4
          %s286 = int_to_ptr.vmem [resolvable:$true] %s285
          %291 = dma.hbm_to_vmem [thread:$0]  %s5, 3072, %s286, [#allocation8], 64, 64, 4
        $region32: #{tpu_custom_call.1} parent=11 // pred_fallthru
          _
        // Predicated region
        $region33: #{tpu_custom_call.1} parent=11 // pred_check
          %p292 = pneg %p174
        $region34: #{tpu_custom_call.1} parent=11 // pred_check_branch
          %294 = sbr.rel (%p292) target = $region36
        $region35: #{tpu_custom_call.1} parent=11 // pred_region
          _
        $region36: #{tpu_custom_call.1} parent=11 // pred_fallthru
          _
        // Predicated region
        $region37: #{tpu_custom_call.1} parent=11 // pred_check
          %p295 = pneg %p195
        $region38: #{tpu_custom_call.1} parent=11 // pred_check_branch
          %297 = sbr.rel (%p295) target = $region40
        $region39: #{tpu_custom_call.1} parent=11 // pred_region
          _
        $region40: #{tpu_custom_call.1} parent=11 // pred_fallthru
          _
        // Predicated region
        $region41: #{tpu_custom_call.1} parent=11 // pred_check
          %p298 = pneg %p216
        $region42: #{tpu_custom_call.1} parent=11 // pred_check_branch
          %300 = sbr.rel (%p298) target = $region44
        $region43: #{tpu_custom_call.1} parent=11 // pred_region
          _
        $region44: #{tpu_custom_call.1} parent=11 // pred_fallthru
          _
      $region12: #{tpu_custom_call.1} parent=5 // pred_fallthru
        _
      %p301 = scmp.lt.s32.totalorder %s22, 2
      // Predicated region
      $region45: #{tpu_custom_call.1} parent=5 // pred_check
        %p302 = pneg %p301
      $region46: #{tpu_custom_call.1} parent=5 // pred_check_branch
        %304 = sbr.rel (%p302) target = $region48
      $region47: #{tpu_custom_call.1} parent=5 // pred_region
        // Predicated region
        $region49: #{tpu_custom_call.1} parent=47 // pred_check
          %p305 = pneg %p42
        $region50: #{tpu_custom_call.1} parent=47 // pred_check_branch
          %307 = sbr.rel (%p305) target = $region52
        $region51: #{tpu_custom_call.1} parent=47 // pred_region
          %s308 = sand.u32 %s32, 1
          %s309 = scalar_lea.sflag [#allocation5], %s308
          %s310 = sand.u32 %s32, 1
          %s311 = smul.addr %s310, 16
          %s312 = scalar_lea.vmem [#allocation4], %s311
          %s314 = ssub.s32 256, 256
          %315 = vsyncadd %s309, %s314
          %s316 = smul.addr %s22, 2
          %s317 = smul.addr %s316, 128
          %s318 = scalar_lea.hbm %s0, %s317
          %s319 = sshll.u32 %s312, 4
          %s320 = int_to_ptr.vmem [resolvable:$true] %s319
          %325 = dma.hbm_to_vmem [thread:$0]  %s318, 256, %s320, %s309, 128, 128, 8
        $region52: #{tpu_custom_call.1} parent=47 // pred_fallthru
          _
      $region48: #{tpu_custom_call.1} parent=5 // pred_fallthru
        _
      %p326 = scmp.le.s32.totalorder 1, %s22
      %p327 = scmp.lt.s32.totalorder %s22, 3
      %p328 = pnand %p326, %p327
      %p329 = pneg %p328
      // Predicated region
      $region53: #{tpu_custom_call.1} parent=5 // pred_check
        _
      $region54: #{tpu_custom_call.1} parent=5 // pred_check_branch
        %331 = sbr.rel (%p328) target = $region56
      $region55: #{tpu_custom_call.1} parent=5 // pred_region
        %s332 = ssub.s32 %s22, 1
        %s333 = sand.u32 %s35, 1
        %s334 = scalar_lea.sflag [#allocation5], %s333
        %s335 = sand.u32 %s35, 1
        %s336 = smul.addr %s335, 16
        %s337 = scalar_lea.vmem [#allocation4], %s336
        // Predicated region
        $region57: #{tpu_custom_call.1} parent=55 // pred_check
          %p338 = pneg %p48
        $region58: #{tpu_custom_call.1} parent=55 // pred_check_branch
          %340 = sbr.rel (%p338) target = $region60
        $region59: #{tpu_custom_call.1} parent=55 // pred_region
          %341 = dma.done %s334, 256
        $region60: #{tpu_custom_call.1} parent=55 // pred_fallthru
          _
        // Predicated region
        $region61: #{tpu_custom_call.1} parent=55 // pred_check
          %p342 = pneg %p69
        $region62: #{tpu_custom_call.1} parent=55 // pred_check_branch
          %344 = sbr.rel (%p342) target = $region64
        $region63: #{tpu_custom_call.1} parent=55 // pred_region
          %345 = dma.done [#allocation8], 3072
        $region64: #{tpu_custom_call.1} parent=55 // pred_fallthru
          _
        // Predicated region
        $region65: #{tpu_custom_call.1} parent=55 // pred_check
          %p346 = pneg %p153
        $region66: #{tpu_custom_call.1} parent=55 // pred_check_branch
          %348 = sbr.rel (%p346) target = $region68
        $region67: #{tpu_custom_call.1} parent=55 // pred_region
          %349 = dma.done [#allocation8], 3072
        $region68: #{tpu_custom_call.1} parent=55 // pred_fallthru
          _
        %s350 = sand.u32 %s35, 1
        %s351 = scalar_lea.sflag [#allocation5], %s350
        %s352 = sand.u32 %s35, 1
        %s353 = smul.addr %s352, 16
        %s354 = scalar_lea.vmem [#allocation4], %s353
        %p355 = pneg %p48
        %p356 = pneg %p45
        %p357 = pneg %p69
        %p358 = pneg %p66
        %p359 = pneg %p90
        %p360 = pneg %p87
        %p361 = pneg %p111
        %p362 = pneg %p108
        %p363 = pneg %p132
        %p364 = pneg %p129
        %p365 = pneg %p153
        %p366 = pneg %p150
        %p367 = pneg %p174
        %p368 = pneg %p171
        %p369 = pneg %p195
        %p370 = pneg %p192
        %p371 = pneg %p216
        %p372 = pneg %p213
        %p373 = pneg %p242
        %p374 = pneg %p239
        %s375 = sand.u32 %s229, 1
        %s376 = scalar_lea.sflag [#allocation6], %s375
        %s377 = sand.u32 %s229, 1
        %s378 = smul.addr %s377, 16
        %s379 = scalar_lea.vmem [#allocation10], %s378
        %381 = vst [vmem:[#allocation2] sm:$0xf] 0
        %382 = vst [vmem:[#allocation3] sm:$0xf] 0
        %v383 = vld [vmem:[%s337] sm:$0xff]
        %v384 = vld [vmem:[%s337 + $0x8] sm:$0xff]
        %v385 = vpack.c.bf16 %v384, %v383
        %v387 = vunpack.c.l.b16 %v385
        %v388 = vunpack.c.h.b16 %v385
        %v389 = vpack.c.b16 %v387, %v387
        %v390 = vpack.c.b16 %v388, %v388
        %393 = vst [vmem:[#allocation2 + $0x4] sm:$0xf] %v389
        %394 = vst [vmem:[#allocation2 + $0x8] sm:$0xf] %v390
        %v395 = vld [vmem:[#allocation2] sm:$0x8]
        %v396 = vld [vmem:[#allocation2 + $0x4] sm:$0xf]
        %v397 = vld [vmem:[#allocation2 + $0x8] sm:$0x7]
        %v398 = vld [vmem:[#allocation2 + $0x8] sm:$0xf]
        %v402 = vunpack.c.l.b16 %v395
        %v403 = vunpack.c.l.b16 %v396
        %v404 = vunpack.c.l.b16 %v397
        %v405 = vpack.c.b16 %v403, %v402
        %v406 = vpack.c.b16 %v404, %v404
        %v408 = vunpack.c.l.b16 %v398
        %v409 = vpack.c.b16 %v408, %v408
        %vm410 = vsmask.f32 7424
        %v412 = vshrl.u32 %v405, 16
        %v414 = vshll.u32 %v405, 16
        %v416 = vrot.slane %v414, 1
        %v417 = vor.u32 %v412, %v416
        %v419 = vshll.u32 %v409, 16
        %v421 = vrot.slane %v419, 1
        %v422 = vsel %vm410, %v417, %v421
        %v423 = vshrl.u32 %v409, 16
        %v425 = vor.u32 %v423, %v421
        %v426 = vpack.c.b16 %v408, %v403
        %v427 = vrot.slane %v426, 5
        %v428 = vld [vmem:[#allocation7] sm:$0xf]
        %v429 = vld [vmem:[#allocation7 + $0x4] sm:$0xf]
        %v430 = vld [vmem:[#allocation7 + $0x8] sm:$0xf]
        %v431 = vld [vmem:[#allocation7 + $0xc] sm:$0xf]
        %v432 = vld [vmem:[#allocation7 + $0x10] sm:$0xf]
        %v433 = vld [vmem:[#allocation7 + $0x14] sm:$0xf]
        %v434 = vld [vmem:[#allocation7 + $0x18] sm:$0xf]
        %v435 = vld [vmem:[#allocation7 + $0x1c] sm:$0xf]
        %v436 = vld [vmem:[#allocation7 + $0x20] sm:$0xf]
        %v437 = vld [vmem:[#allocation7 + $0x24] sm:$0xf]
        %v438 = vld [vmem:[#allocation7 + $0x28] sm:$0xf]
        %v439 = vld [vmem:[#allocation7 + $0x2c] sm:$0xf]
        %v440 = vld [vmem:[#allocation7 + $0x30] sm:$0xf]
        %v441 = vld [vmem:[#allocation7 + $0x34] sm:$0xf]
        %v442 = vld [vmem:[#allocation7 + $0x38] sm:$0xf]
        %v443 = vld [vmem:[#allocation7 + $0x3c] sm:$0xf]
        %v444 = vld [vmem:[#allocation7 + $0x40] sm:$0xf]
        %v445 = vld [vmem:[#allocation7 + $0x44] sm:$0xf]
        %v446 = vld [vmem:[#allocation7 + $0x48] sm:$0xf]
        %v447 = vld [vmem:[#allocation7 + $0x4c] sm:$0xf]
        %v448 = vld [vmem:[#allocation7 + $0x50] sm:$0xf]
        %v449 = vld [vmem:[#allocation7 + $0x54] sm:$0xf]
        %v450 = vld [vmem:[#allocation7 + $0x58] sm:$0xf]
        %v451 = vld [vmem:[#allocation7 + $0x5c] sm:$0xf]
        %v452 = vld [vmem:[#allocation7 + $0x60] sm:$0xf]
        %v453 = vld [vmem:[#allocation7 + $0x64] sm:$0xf]
        %v454 = vld [vmem:[#allocation7 + $0x68] sm:$0xf]
        %v455 = vld [vmem:[#allocation7 + $0x6c] sm:$0xf]
        %v456 = vld [vmem:[#allocation7 + $0x70] sm:$0xf]
        %v457 = vld [vmem:[#allocation7 + $0x74] sm:$0xf]
        %v458 = vld [vmem:[#allocation7 + $0x78] sm:$0xf]
        %v459 = vld [vmem:[#allocation7 + $0x7c] sm:$0xf]
        %v460 = vld [vmem:[#allocation7 + $0x80] sm:$0xf]
        %v461 = vld [vmem:[#allocation7 + $0x84] sm:$0xf]
        %v462 = vld [vmem:[#allocation7 + $0x88] sm:$0xf]
        %v463 = vld [vmem:[#allocation7 + $0x8c] sm:$0xf]
        %v464 = vld [vmem:[#allocation7 + $0x90] sm:$0xf]
        %v465 = vld [vmem:[#allocation7 + $0x94] sm:$0xf]
        %v466 = vld [vmem:[#allocation7 + $0x98] sm:$0xf]
        %v467 = vld [vmem:[#allocation7 + $0x9c] sm:$0xf]
        %v468 = vld [vmem:[#allocation7 + $0xa0] sm:$0xf]
        %v469 = vld [vmem:[#allocation7 + $0xa4] sm:$0xf]
        %v470 = vld [vmem:[#allocation7 + $0xa8] sm:$0xf]
        %v471 = vld [vmem:[#allocation7 + $0xac] sm:$0xf]
        %v472 = vld [vmem:[#allocation7 + $0xb0] sm:$0xf]
        %v473 = vld [vmem:[#allocation7 + $0xb4] sm:$0xf]
        %v474 = vld [vmem:[#allocation7 + $0xb8] sm:$0xf]
        %v475 = vld [vmem:[#allocation7 + $0xbc] sm:$0xf]
        %v476 = vld [vmem:[%s2] sm:$0x1]
        %v478 = vlaneseq
        %v479 = vshrl.u32 %v478, 7
        %v480 = vsub.s32 0, %v479
        %v481 = vrot.slane %v476, %v480
        %vm483 = vcmask 1044480
        %v484 = vrot.slane %v405, 3
        %v485 = vrot.slane %v406, 3
        %v486 = vsel %vm483, %v484, %v485
        %v487 = vrot.slane %v422, 3
        %v488 = vrot.slane %v425, 3
        %v489 = vsel %vm483, %v487, %v488
        %v490 = vrot.slane %v427, 3
        %v491 = vsel %vm483, %v490, %v490
        %v543 = vunpack.c.l.b16 %v428
        %v544 = vunpack.c.l.b16 %v429
        %v545 = vunpack.c.l.b16 %v430
        %v546 = vunpack.c.l.b16 %v431
        %v547 = vunpack.c.l.b16 %v432
        %v548 = vunpack.c.l.b16 %v433
        %v549 = vunpack.c.l.b16 %v434
        %v550 = vunpack.c.l.b16 %v435
        %v551 = vunpack.c.l.b16 %v436
        %v552 = vunpack.c.l.b16 %v437
        %v553 = vunpack.c.l.b16 %v438
        %v554 = vunpack.c.l.b16 %v439
        %v555 = vunpack.c.l.b16 %v440
        %v556 = vunpack.c.l.b16 %v441
        %v557 = vunpack.c.l.b16 %v442
        %v558 = vunpack.c.l.b16 %v443
        %v559 = vunpack.c.l.b16 %v444
        %v560 = vunpack.c.l.b16 %v445
        %v561 = vunpack.c.l.b16 %v446
        %v562 = vunpack.c.l.b16 %v447
        %v563 = vunpack.c.l.b16 %v448
        %v564 = vunpack.c.l.b16 %v449
        %v565 = vunpack.c.l.b16 %v450
        %v566 = vunpack.c.l.b16 %v451
        %v567 = vunpack.c.l.b16 %v452
        %v568 = vunpack.c.l.b16 %v453
        %v569 = vunpack.c.l.b16 %v454
        %v570 = vunpack.c.l.b16 %v455
        %v571 = vunpack.c.l.b16 %v456
        %v572 = vunpack.c.l.b16 %v457
        %v573 = vunpack.c.l.b16 %v458
        %v574 = vunpack.c.l.b16 %v459
        %v575 = vunpack.c.l.b16 %v460
        %v576 = vunpack.c.l.b16 %v461
        %v577 = vunpack.c.l.b16 %v462
        %v578 = vunpack.c.l.b16 %v463
        %v579 = vunpack.c.l.b16 %v464
        %v580 = vunpack.c.l.b16 %v465
        %v581 = vunpack.c.l.b16 %v466
        %v582 = vunpack.c.l.b16 %v467
        %v583 = vunpack.c.l.b16 %v468
        %v584 = vunpack.c.l.b16 %v469
        %v585 = vunpack.c.l.b16 %v470
        %v586 = vunpack.c.l.b16 %v471
        %v587 = vunpack.c.l.b16 %v472
        %v588 = vunpack.c.l.b16 %v473
        %v589 = vunpack.c.l.b16 %v474
        %v590 = vunpack.c.l.b16 %v475
        %v591 = vpack.c.b16 %v544, %v543
        %v592 = vpack.c.b16 %v546, %v545
        %v593 = vpack.c.b16 %v548, %v547
        %v594 = vpack.c.b16 %v550, %v549
        %v595 = vpack.c.b16 %v552, %v551
        %v596 = vpack.c.b16 %v554, %v553
        %v597 = vpack.c.b16 %v556, %v555
        %v598 = vpack.c.b16 %v558, %v557
        %v599 = vpack.c.b16 %v560, %v559
        %v600 = vpack.c.b16 %v562, %v561
        %v601 = vpack.c.b16 %v564, %v563
        %v602 = vpack.c.b16 %v566, %v565
        %v603 = vpack.c.b16 %v568, %v567
        %v604 = vpack.c.b16 %v570, %v569
        %v605 = vpack.c.b16 %v572, %v571
        %v606 = vpack.c.b16 %v574, %v573
        %v607 = vpack.c.b16 %v576, %v575
        %v608 = vpack.c.b16 %v578, %v577
        %v609 = vpack.c.b16 %v580, %v579
        %v610 = vpack.c.b16 %v582, %v581
        %v611 = vpack.c.b16 %v584, %v583
        %v612 = vpack.c.b16 %v586, %v585
        %v613 = vpack.c.b16 %v588, %v587
        %v614 = vpack.c.b16 %v590, %v589
        %639 = vmatprep.subr.bf16.mxu0 0
        %640 = vmatpush1.bf16.msra.mxu0 %v591
        %641 = vmatprep.subr.bf16.mxu0 0
        %642 = vmatpush1.bf16.msra.mxu0 %v592
        %643 = vmatprep.subr.bf16.mxu0 0
        %644 = vmatpush1.bf16.msra.mxu0 %v593
        %645 = vmatprep.subr.bf16.mxu0 0
        %646 = vmatpush1.bf16.msra.mxu0 %v594
        %647 = vmatprep.subr.bf16.mxu0 0
        %648 = vmatpush1.bf16.msra.mxu0 %v595
        %649 = vmatprep.subr.bf16.mxu0 0
        %650 = vmatpush1.bf16.msra.mxu0 %v596
        %651 = vmatprep.subr.bf16.mxu0 0
        %652 = vmatpush1.bf16.msra.mxu0 %v597
        %653 = vmatprep.subr.bf16.mxu0 0
        %654 = vmatpush1.bf16.msra.mxu0 %v598
        %655 = vmatprep.subr.bf16.mxu0 0
        %656 = vmatpush1.bf16.msra.mxu0 %v599
        %657 = vmatprep.subr.bf16.mxu0 0
        %658 = vmatpush1.bf16.msra.mxu0 %v600
        %659 = vmatprep.subr.bf16.mxu0 0
        %660 = vmatpush1.bf16.msra.mxu0 %v601
        %661 = vmatprep.subr.bf16.mxu0 0
        %662 = vmatpush1.bf16.msra.mxu0 %v602
        %663 = vmatprep.subr.bf16.mxu0 0
        %664 = vmatpush1.bf16.msra.mxu0 %v603
        %665 = vmatprep.subr.bf16.mxu0 0
        %666 = vmatpush1.bf16.msra.mxu0 %v604
        %667 = vmatprep.subr.bf16.mxu0 0
        %668 = vmatpush1.bf16.msra.mxu0 %v605
        %669 = vmatprep.subr.bf16.mxu0 0
        %670 = vmatpush1.bf16.msra.mxu0 %v606
        %671 = vmatprep.mubr.bf16.mxu0 %v489
        %672 = vmatmul.mubr.bf16.gmra.mrb[0].mxu0 %v486
        %v673 = vpop.f32.mrb[0].mxu0
        %v674 = vadd.f32 %v481, %v673
        %v675 = vpop.f32.mrb[0].mxu0
        %v676 = vpop.f32.mrb[0].mxu0
        %v677 = vadd.f32 %v481, %v676
        %v678 = vpop.f32.mrb[0].mxu0
        %679 = vdwg.mxu0
        %680 = vmatprep.subr.bf16.mxu0 0
        %681 = vmatpush1.bf16.msra.mxu0 %v607
        %682 = vmatprep.subr.bf16.mxu0 0
        %683 = vmatpush1.bf16.msra.mxu0 %v608
        %684 = vmatprep.subr.bf16.mxu0 0
        %685 = vmatpush1.bf16.msra.mxu0 %v609
        %686 = vmatprep.subr.bf16.mxu0 0
        %687 = vmatpush1.bf16.msra.mxu0 %v610
        %688 = vmatprep.subr.bf16.mxu0 0
        %689 = vmatpush1.bf16.msra.mxu0 %v611
        %690 = vmatprep.subr.bf16.mxu0 0
        %691 = vmatpush1.bf16.msra.mxu0 %v612
        %692 = vmatprep.subr.bf16.mxu0 0
        %693 = vmatpush1.bf16.msra.mxu0 %v613
        %694 = vmatprep.subr.bf16.mxu0 0
        %695 = vmatpush1.bf16.msra.mxu0 %v614
        %696 = vmatprep.subr.bf16.mxu0 0
        %697 = vmatpush1.bf16.msra.mxu0 0
        %698 = vmatprep.subr.bf16.mxu0 0
        %699 = vmatpush1.bf16.msra.mxu0 0
        %700 = vmatprep.subr.bf16.mxu0 0
        %701 = vmatpush1.bf16.msra.mxu0 0
        %702 = vmatprep.subr.bf16.mxu0 0
        %703 = vmatpush1.bf16.msra.mxu0 0
        %704 = vmatprep.subr.bf16.mxu0 0
        %705 = vmatpush1.bf16.msra.mxu0 0
        %706 = vmatprep.subr.bf16.mxu0 0
        %707 = vmatpush1.bf16.msra.mxu0 0
        %708 = vmatprep.subr.bf16.mxu0 0
        %709 = vmatpush1.bf16.msra.mxu0 0
        %710 = vmatprep.subr.bf16.mxu0 0
        %711 = vmatpush1.bf16.msra.mxu0 0
        %712 = vmatprep.mubr.bf16.mxu0 0
        %713 = vmatmul.mubr.bf16.gmra.mrb[0].mxu0 %v491
        %v714 = vpop.f32.mrb[0].mxu0
        %v715 = vadd.f32 %v674, %v714
        %v716 = vpop.f32.mrb[0].mxu0
        %v717 = vpop.f32.mrb[0].mxu0
        %v718 = vadd.f32 %v677, %v717
        %v719 = vpop.f32.mrb[0].mxu0
        %720 = vdwg.mxu0
        %v721 = vld [vmem:[%s3] sm:$0x1]
        %v722 = vld [vmem:[%s4] sm:$0x1]
        %723 = vadd.xlane.f32.xlu0 %v715
        %v724 = vpop.xlane.xlu0 %723
        %725 = vadd.xlane.f32.xlu0 %v718
        %v726 = vpop.xlane.xlu0 %725
        %v727 = vmul.f32 %v724, 0.03125
        %v728 = vmul.f32 %v726, 0.03125
        %v729 = vsub.f32 %v715, %v727
        %v730 = vsub.f32 %v718, %v728
        %v731 = vlaneseq
        %v732 = vand.u32 %v731, 127
        %vm733 = vcmp.lt.s32.totalorder %v732, 32
        %v734 = vsel %vm733, 1, 0
        %vm735 = vcmp.eq.s32.totalorder %v734, 1
        %v736 = vsel %vm735, %v729, 0.0
        %v737 = vsel %vm735, %v730, 0.0
        %v738 = vmul.f32 %v736, %v736
        %v739 = vmul.f32 %v737, %v737
        %740 = vadd.xlane.f32.xlu0 %v738
        %v741 = vpop.xlane.xlu0 %740
        %742 = vadd.xlane.f32.xlu0 %v739
        %v743 = vpop.xlane.xlu0 %742
        %v744 = vmul.f32 %v741, 0.032258064
        %v745 = vmul.f32 %v743, 0.032258064
        %v746 = vadd.f32 %v744, 1e-08
        %v747 = vadd.f32 %v745, 1e-08
        %v748 = vrsqrt.pop %v746
        %v749 = vrsqrt.pop %v747
        %v750 = vmul.f32 %v736, %v748
        %v751 = vmul.f32 %v737, %v749
        %v753 = vlaneseq
        %v754 = vshrl.u32 %v753, 7
        %v755 = vsub.s32 0, %v754
        %v756 = vrot.slane %v721, %v755
        %v758 = vmul.f32 %v756, %v750
        %v759 = vmul.f32 %v756, %v751
        %v761 = vlaneseq
        %v762 = vshrl.u32 %v761, 7
        %v763 = vsub.s32 0, %v762
        %v764 = vrot.slane %v722, %v763
        %v766 = vadd.f32 %v758, %v764
        %v767 = vadd.f32 %v759, %v764
        %v768 = vmax.f32 %v766, 0.0
        %v769 = vmax.f32 %v767, 0.0
        %v770 = vpack.c.bf16 %v769, %v768
        %v772 = vunpack.c.l.b16 %v770
        %v773 = vunpack.c.h.b16 %v770
        %v774 = vpack.c.b16 %v772, %v772
        %v775 = vpack.c.b16 %v773, %v773
        %778 = vst [vmem:[#allocation3 + $0x4] sm:$0xf] %v774
        %779 = vst [vmem:[#allocation3 + $0x8] sm:$0xf] %v775
        %v780 = vld [vmem:[#allocation3] sm:$0xc]
        %v781 = vld [vmem:[#allocation3 + $0x4] sm:$0xf]
        %v782 = vld [vmem:[#allocation3 + $0x8] sm:$0x3]
        %v783 = vld [vmem:[#allocation3] sm:$0x8]
        %v784 = vld [vmem:[#allocation3 + $0x8] sm:$0x7]
        %v785 = vld [vmem:[#allocation3 + $0x8] sm:$0xf]
        %v789 = vunpack.c.l.b16 %v780
        %v790 = vunpack.c.l.b16 %v781
        %v791 = vunpack.c.l.b16 %v782
        %v792 = vpack.c.b16 %v790, %v789
        %v793 = vpack.c.b16 %v791, %v791
        %v796 = vunpack.c.l.b16 %v783
        %v797 = vunpack.c.l.b16 %v784
        %v798 = vpack.c.b16 %v790, %v796
        %v799 = vpack.c.b16 %v797, %v797
        %vm800 = vcmask 1046528
        %v801 = vrot.slane %v798, 1
        %v802 = vrot.slane %v799, 1
        %v803 = vsel %vm800, %v801, %v802
        %v805 = vunpack.c.l.b16 %v785
        %v806 = vpack.c.b16 %v805, %v790
        %v807 = vrot.slane %v806, 6
        %v808 = vld [vmem:[#allocation9] sm:$0xf]
        %v809 = vld [vmem:[#allocation9 + $0x4] sm:$0xf]
        %v810 = vld [vmem:[#allocation9 + $0x8] sm:$0xf]
        %v811 = vld [vmem:[#allocation9 + $0xc] sm:$0xf]
        %v812 = vld [vmem:[#allocation9 + $0x10] sm:$0xf]
        %v813 = vld [vmem:[#allocation9 + $0x14] sm:$0xf]
        %v814 = vld [vmem:[#allocation9 + $0x18] sm:$0xf]
        %v815 = vld [vmem:[#allocation9 + $0x1c] sm:$0xf]
        %v816 = vld [vmem:[#allocation9 + $0x20] sm:$0xf]
        %v817 = vld [vmem:[#allocation9 + $0x24] sm:$0xf]
        %v818 = vld [vmem:[#allocation9 + $0x28] sm:$0xf]
        %v819 = vld [vmem:[#allocation9 + $0x2c] sm:$0xf]
        %v820 = vld [vmem:[#allocation9 + $0x30] sm:$0xf]
        %v821 = vld [vmem:[#allocation9 + $0x34] sm:$0xf]
        %v822 = vld [vmem:[#allocation9 + $0x38] sm:$0xf]
        %v823 = vld [vmem:[#allocation9 + $0x3c] sm:$0xf]
        %v824 = vld [vmem:[#allocation9 + $0x40] sm:$0xf]
        %v825 = vld [vmem:[#allocation9 + $0x44] sm:$0xf]
        %v826 = vld [vmem:[#allocation9 + $0x48] sm:$0xf]
        %v827 = vld [vmem:[#allocation9 + $0x4c] sm:$0xf]
        %v828 = vld [vmem:[#allocation9 + $0x50] sm:$0xf]
        %v829 = vld [vmem:[#allocation9 + $0x54] sm:$0xf]
        %v830 = vld [vmem:[#allocation9 + $0x58] sm:$0xf]
        %v831 = vld [vmem:[#allocation9 + $0x5c] sm:$0xf]
        %v832 = vld [vmem:[#allocation9 + $0x60] sm:$0xf]
        %v833 = vld [vmem:[#allocation9 + $0x64] sm:$0xf]
        %v834 = vld [vmem:[#allocation9 + $0x68] sm:$0xf]
        %v835 = vld [vmem:[#allocation9 + $0x6c] sm:$0xf]
        %v836 = vld [vmem:[#allocation9 + $0x70] sm:$0xf]
        %v837 = vld [vmem:[#allocation9 + $0x74] sm:$0xf]
        %v838 = vld [vmem:[#allocation9 + $0x78] sm:$0xf]
        %v839 = vld [vmem:[#allocation9 + $0x7c] sm:$0xf]
        %v840 = vld [vmem:[#allocation9 + $0x80] sm:$0xf]
        %v841 = vld [vmem:[#allocation9 + $0x84] sm:$0xf]
        %v842 = vld [vmem:[#allocation9 + $0x88] sm:$0xf]
        %v843 = vld [vmem:[#allocation9 + $0x8c] sm:$0xf]
        %v844 = vld [vmem:[#allocation9 + $0x90] sm:$0xf]
        %v845 = vld [vmem:[#allocation9 + $0x94] sm:$0xf]
        %v846 = vld [vmem:[#allocation9 + $0x98] sm:$0xf]
        %v847 = vld [vmem:[#allocation9 + $0x9c] sm:$0xf]
        %v848 = vld [vmem:[#allocation9 + $0xa0] sm:$0xf]
        %v849 = vld [vmem:[#allocation9 + $0xa4] sm:$0xf]
        %v850 = vld [vmem:[#allocation9 + $0xa8] sm:$0xf]
        %v851 = vld [vmem:[#allocation9 + $0xac] sm:$0xf]
        %v852 = vld [vmem:[#allocation9 + $0xb0] sm:$0xf]
        %v853 = vld [vmem:[#allocation9 + $0xb4] sm:$0xf]
        %v854 = vld [vmem:[#allocation9 + $0xb8] sm:$0xf]
        %v855 = vld [vmem:[#allocation9 + $0xbc] sm:$0xf]
        %v856 = vld [vmem:[%s6] sm:$0x1]
        %v858 = vlaneseq
        %v859 = vshrl.u32 %v858, 7
        %v860 = vsub.s32 0, %v859
        %v861 = vrot.slane %v856, %v860
        %vm863 = vcmask 1045504
        %v864 = vrot.slane %v792, 2
        %v865 = vrot.slane %v793, 2
        %v866 = vsel %vm863, %v864, %v865
        %v867 = vrot.slane %v803, 2
        %v868 = vrot.slane %v802, 2
        %v869 = vsel %vm863, %v867, %v868
        %v870 = vrot.slane %v807, 2
        %v871 = vsel %vm863, %v870, %v870
        %v923 = vunpack.c.l.b16 %v808
        %v924 = vunpack.c.l.b16 %v809
        %v925 = vunpack.c.l.b16 %v810
        %v926 = vunpack.c.l.b16 %v811
        %v927 = vunpack.c.l.b16 %v812
        %v928 = vunpack.c.l.b16 %v813
        %v929 = vunpack.c.l.b16 %v814
        %v930 = vunpack.c.l.b16 %v815
        %v931 = vunpack.c.l.b16 %v816
        %v932 = vunpack.c.l.b16 %v817
        %v933 = vunpack.c.l.b16 %v818
        %v934 = vunpack.c.l.b16 %v819
        %v935 = vunpack.c.l.b16 %v820
        %v936 = vunpack.c.l.b16 %v821
        %v937 = vunpack.c.l.b16 %v822
        %v938 = vunpack.c.l.b16 %v823
        %v939 = vunpack.c.l.b16 %v824
        %v940 = vunpack.c.l.b16 %v825
        %v941 = vunpack.c.l.b16 %v826
        %v942 = vunpack.c.l.b16 %v827
        %v943 = vunpack.c.l.b16 %v828
        %v944 = vunpack.c.l.b16 %v829
        %v945 = vunpack.c.l.b16 %v830
        %v946 = vunpack.c.l.b16 %v831
        %v947 = vunpack.c.l.b16 %v832
        %v948 = vunpack.c.l.b16 %v833
        %v949 = vunpack.c.l.b16 %v834
        %v950 = vunpack.c.l.b16 %v835
        %v951 = vunpack.c.l.b16 %v836
        %v952 = vunpack.c.l.b16 %v837
        %v953 = vunpack.c.l.b16 %v838
        %v954 = vunpack.c.l.b16 %v839
        %v955 = vunpack.c.l.b16 %v840
        %v956 = vunpack.c.l.b16 %v841
        %v957 = vunpack.c.l.b16 %v842
        %v958 = vunpack.c.l.b16 %v843
        %v959 = vunpack.c.l.b16 %v844
        %v960 = vunpack.c.l.b16 %v845
        %v961 = vunpack.c.l.b16 %v846
        %v962 = vunpack.c.l.b16 %v847
        %v963 = vunpack.c.l.b16 %v848
        %v964 = vunpack.c.l.b16 %v849
        %v965 = vunpack.c.l.b16 %v850
        %v966 = vunpack.c.l.b16 %v851
        %v967 = vunpack.c.l.b16 %v852
        %v968 = vunpack.c.l.b16 %v853
        %v969 = vunpack.c.l.b16 %v854
        %v970 = vunpack.c.l.b16 %v855
        %v971 = vpack.c.b16 %v924, %v923
        %v972 = vpack.c.b16 %v926, %v925
        %v973 = vpack.c.b16 %v928, %v927
        %v974 = vpack.c.b16 %v930, %v929
        %v975 = vpack.c.b16 %v932, %v931
        %v976 = vpack.c.b16 %v934, %v933
        %v977 = vpack.c.b16 %v936, %v935
        %v978 = vpack.c.b16 %v938, %v937
        %v979 = vpack.c.b16 %v940, %v939
        %v980 = vpack.c.b16 %v942, %v941
        %v981 = vpack.c.b16 %v944, %v943
        %v982 = vpack.c.b16 %v946, %v945
        %v983 = vpack.c.b16 %v948, %v947
        %v984 = vpack.c.b16 %v950, %v949
        %v985 = vpack.c.b16 %v952, %v951
        %v986 = vpack.c.b16 %v954, %v953
        %v987 = vpack.c.b16 %v956, %v955
        %v988 = vpack.c.b16 %v958, %v957
        %v989 = vpack.c.b16 %v960, %v959
        %v990 = vpack.c.b16 %v962, %v961
        %v991 = vpack.c.b16 %v964, %v963
        %v992 = vpack.c.b16 %v966, %v965
        %v993 = vpack.c.b16 %v968, %v967
        %v994 = vpack.c.b16 %v970, %v969
        %1019 = vmatprep.subr.bf16.mxu0 0
        %1020 = vmatpush1.bf16.msra.mxu0 %v971
        %1021 = vmatprep.subr.bf16.mxu0 0
        %1022 = vmatpush1.bf16.msra.mxu0 %v972
        %1023 = vmatprep.subr.bf16.mxu0 0
        %1024 = vmatpush1.bf16.msra.mxu0 %v973
        %1025 = vmatprep.subr.bf16.mxu0 0
        %1026 = vmatpush1.bf16.msra.mxu0 %v974
        %1027 = vmatprep.subr.bf16.mxu0 0
        %1028 = vmatpush1.bf16.msra.mxu0 %v975
        %1029 = vmatprep.subr.bf16.mxu0 0
        %1030 = vmatpush1.bf16.msra.mxu0 %v976
        %1031 = vmatprep.subr.bf16.mxu0 0
        %1032 = vmatpush1.bf16.msra.mxu0 %v977
        %1033 = vmatprep.subr.bf16.mxu0 0
        %1034 = vmatpush1.bf16.msra.mxu0 %v978
        %1035 = vmatprep.subr.bf16.mxu0 0
        %1036 = vmatpush1.bf16.msra.mxu0 %v979
        %1037 = vmatprep.subr.bf16.mxu0 0
        %1038 = vmatpush1.bf16.msra.mxu0 %v980
        %1039 = vmatprep.subr.bf16.mxu0 0
        %1040 = vmatpush1.bf16.msra.mxu0 %v981
        %1041 = vmatprep.subr.bf16.mxu0 0
        %1042 = vmatpush1.bf16.msra.mxu0 %v982
        %1043 = vmatprep.subr.bf16.mxu0 0
        %1044 = vmatpush1.bf16.msra.mxu0 %v983
        %1045 = vmatprep.subr.bf16.mxu0 0
        %1046 = vmatpush1.bf16.msra.mxu0 %v984
        %1047 = vmatprep.subr.bf16.mxu0 0
        %1048 = vmatpush1.bf16.msra.mxu0 %v985
        %1049 = vmatprep.subr.bf16.mxu0 0
        %1050 = vmatpush1.bf16.msra.mxu0 %v986
        %1051 = vmatprep.mubr.bf16.mxu0 %v869
        %1052 = vmatmul.mubr.bf16.gmra.mrb[0].mxu0 %v866
        %v1053 = vpop.f32.mrb[0].mxu0
        %v1054 = vadd.f32 %v861, %v1053
        %v1055 = vpop.f32.mrb[0].mxu0
        %v1056 = vpop.f32.mrb[0].mxu0
        %v1057 = vadd.f32 %v861, %v1056
        %v1058 = vpop.f32.mrb[0].mxu0
        %1059 = vdwg.mxu0
        %1060 = vmatprep.subr.bf16.mxu0 0
        %1061 = vmatpush1.bf16.msra.mxu0 %v987
        %1062 = vmatprep.subr.bf16.mxu0 0
        %1063 = vmatpush1.bf16.msra.mxu0 %v988
        %1064 = vmatprep.subr.bf16.mxu0 0
        %1065 = vmatpush1.bf16.msra.mxu0 %v989
        %1066 = vmatprep.subr.bf16.mxu0 0
        %1067 = vmatpush1.bf16.msra.mxu0 %v990
        %1068 = vmatprep.subr.bf16.mxu0 0
        %1069 = vmatpush1.bf16.msra.mxu0 %v991
        %1070 = vmatprep.subr.bf16.mxu0 0
        %1071 = vmatpush1.bf16.msra.mxu0 %v992
        %1072 = vmatprep.subr.bf16.mxu0 0
        %1073 = vmatpush1.bf16.msra.mxu0 %v993
        %1074 = vmatprep.subr.bf16.mxu0 0
        %1075 = vmatpush1.bf16.msra.mxu0 %v994
        %1076 = vmatprep.subr.bf16.mxu0 0
        %1077 = vmatpush1.bf16.msra.mxu0 0
        %1078 = vmatprep.subr.bf16.mxu0 0
        %1079 = vmatpush1.bf16.msra.mxu0 0
        %1080 = vmatprep.subr.bf16.mxu0 0
        %1081 = vmatpush1.bf16.msra.mxu0 0
        %1082 = vmatprep.subr.bf16.mxu0 0
        %1083 = vmatpush1.bf16.msra.mxu0 0
        %1084 = vmatprep.subr.bf16.mxu0 0
        %1085 = vmatpush1.bf16.msra.mxu0 0
        %1086 = vmatprep.subr.bf16.mxu0 0
        %1087 = vmatpush1.bf16.msra.mxu0 0
        %1088 = vmatprep.subr.bf16.mxu0 0
        %1089 = vmatpush1.bf16.msra.mxu0 0
        %1090 = vmatprep.subr.bf16.mxu0 0
        %1091 = vmatpush1.bf16.msra.mxu0 0
        %1092 = vmatprep.mubr.bf16.mxu0 0
        %1093 = vmatmul.mubr.bf16.gmra.mrb[0].mxu0 %v871
        %v1094 = vpop.f32.mrb[0].mxu0
        %v1095 = vadd.f32 %v1054, %v1094
        %v1096 = vpop.f32.mrb[0].mxu0
        %v1097 = vpop.f32.mrb[0].mxu0
        %v1098 = vadd.f32 %v1057, %v1097
        %v1099 = vpop.f32.mrb[0].mxu0
        %1100 = vdwg.mxu0
        %v1101 = vld [vmem:[%s7] sm:$0x1]
        %v1102 = vld [vmem:[%s8] sm:$0x1]
        %1103 = vadd.xlane.f32.xlu0 %v1095
        %v1104 = vpop.xlane.xlu0 %1103
        %1105 = vadd.xlane.f32.xlu0 %v1098
        %v1106 = vpop.xlane.xlu0 %1105
        %v1107 = vmul.f32 %v1104, 0.03125
        %v1108 = vmul.f32 %v1106, 0.03125
        %v1109 = vsub.f32 %v1095, %v1107
        %v1110 = vsub.f32 %v1098, %v1108
        %v1111 = vsel %vm735, %v1109, 0.0
        %v1112 = vsel %vm735, %v1110, 0.0
        %v1113 = vmul.f32 %v1111, %v1111
        %v1114 = vmul.f32 %v1112, %v1112
        %1115 = vadd.xlane.f32.xlu0 %v1113
        %v1116 = vpop.xlane.xlu0 %1115
        %1117 = vadd.xlane.f32.xlu0 %v1114
        %v1118 = vpop.xlane.xlu0 %1117
        %v1119 = vmul.f32 %v1116, 0.032258064
        %v1120 = vmul.f32 %v1118, 0.032258064
        %v1121 = vadd.f32 %v1119, 1e-08
        %v1122 = vadd.f32 %v1120, 1e-08
        %v1123 = vrsqrt.pop %v1121
        %v1124 = vrsqrt.pop %v1122
        %v1125 = vmul.f32 %v1111, %v1123
        %v1126 = vmul.f32 %v1112, %v1124
        %v1128 = vlaneseq
        %v1129 = vshrl.u32 %v1128, 7
        %v1130 = vsub.s32 0, %v1129
        %v1131 = vrot.slane %v1101, %v1130
        %v1133 = vmul.f32 %v1131, %v1125
        %v1134 = vmul.f32 %v1131, %v1126
        %v1136 = vlaneseq
        %v1137 = vshrl.u32 %v1136, 7
        %v1138 = vsub.s32 0, %v1137
        %v1139 = vrot.slane %v1102, %v1138
        %v1141 = vadd.f32 %v1133, %v1139
        %v1142 = vadd.f32 %v1134, %v1139
        %v1143 = vmax.f32 %v1141, 0.0
        %v1144 = vmax.f32 %v1142, 0.0
        %v1145 = vld [vmem:[%s337] sm:$0xff]
        %v1146 = vld [vmem:[%s337 + $0x8] sm:$0xff]
        %v1147 = vadd.f32 %v1145, %v1143
        %v1148 = vadd.f32 %v1146, %v1144
        %1149 = vst [vmem:[%s379] sm:$0xff] %v1147
        %1150 = vst [vmem:[%s379 + $0x8] sm:$0xff] %v1148
        %s1151 = sand.u32 %s229, 1
        %s1152 = scalar_lea.sflag [#allocation6], %s1151
        %s1153 = sand.u32 %s229, 1
        %s1154 = smul.addr %s1153, 16
        %s1155 = scalar_lea.vmem [#allocation10], %s1154
        // Predicated region
        $region69: #{tpu_custom_call.1} parent=55 // pred_check
          %p1156 = pneg %p239
        $region70: #{tpu_custom_call.1} parent=55 // pred_check_branch
          %1158 = sbr.rel (%p1156) target = $region72
        $region71: #{tpu_custom_call.1} parent=55 // pred_region
          %s1160 = ssub.s32 256, 256
          %1161 = vsyncadd %s1152, %s1160
          %s1162 = smul.addr %s27, 2
          %s1163 = smul.addr %s1162, 128
          %s1164 = scalar_lea.hbm %s9, %s1163
          %s1165 = sshll.u32 %s1155, 4
          %s1166 = int_to_ptr.vmem [resolvable:$true] %s1165
          %1171 = dma.vmem_to_hbm [thread:$0]  %s1166, 256, %s1164, %s1152, 128, 128, 8
        $region72: #{tpu_custom_call.1} parent=55 // pred_fallthru
          _
      $region56: #{tpu_custom_call.1} parent=5 // pred_fallthru
        _
      %p1172 = scmp.le.s32.totalorder 2, %s22
      // Predicated region
      $region73: #{tpu_custom_call.1} parent=5 // pred_check
        %p1173 = pneg %p1172
      $region74: #{tpu_custom_call.1} parent=5 // pred_check_branch
        %1175 = sbr.rel (%p1173) target = $region76
      $region75: #{tpu_custom_call.1} parent=5 // pred_region
        %s1176 = ssub.s32 %s22, 2
        // Predicated region
        $region77: #{tpu_custom_call.1} parent=75 // pred_check
          %p1177 = pneg %p245
        $region78: #{tpu_custom_call.1} parent=75 // pred_check_branch
          %1179 = sbr.rel (%p1177) target = $region80
        $region79: #{tpu_custom_call.1} parent=75 // pred_region
          %s1180 = sand.u32 %s230, 1
          %s1181 = scalar_lea.sflag [#allocation6], %s1180
          %s1182 = sand.u32 %s230, 1
          %s1183 = smul.addr %s1182, 16
          %s1184 = scalar_lea.vmem [#allocation10], %s1183
          %1185 = dma.done %s1181, 256
        $region80: #{tpu_custom_call.1} parent=75 // pred_fallthru
          _
      $region76: #{tpu_custom_call.1} parent=5 // pred_fallthru
        _
    $region6: #{tpu_custom_call.1} parent=1 // loop_footer
      %s26 = sadd.s32 1, %s22
    $region7: #{tpu_custom_call.1} parent=1 // loop_footer_branch
      %21 = sbr.rel target = $region3
    $region8: #{tpu_custom_call.1} parent=1 // loop_exit
      _
    %1186 = vsyncpa [#allocation5], 1
    %s1187 = scalar_lea.sflag [#allocation5], 1
    %1188 = vsyncpa %s1187, 1
    %1189 = vsyncpa [#allocation8], 1
    %1190 = vsyncpa [#allocation6], 1
    %s1191 = scalar_lea.sflag [#allocation6], 1
    %1192 = vsyncpa %s1191, 1

</llo_original>
